<compile_context>
chip_gen: v6e
topology: v6e:2x2x1
jax: 0.10.0
libtpu: 0.0.40
codegen_flags: <defaults>
</compile_context>

<pallas_src>
import jax
import jax.numpy as jnp
from jax.experimental import pallas as pl
from jax.experimental.pallas import tpu as pltpu

# ----------------------------- configuration --------------------------------
N_OBJECTS, N_COLORS, N_STATES = 11, 6, 2    # len(OBJECT_TO_IDX), len(COLOR_TO_IDX), 2
E_TOK = 8                                    # cfg.token_embed_size
C_IN = 3 * E_TOK                             # 24 conv-input channels [color|object|state]
F_IMG = 32                                   # cfg.image_embed_size == semi_memory_size
F2 = F_IMG // 2                              # 16
N_ACT = 7                                    # action_space.n
B = 2
H = W = 7                                    # minigrid observation grid
HW = H * W                                   # 49

N_TOK = N_COLORS + N_OBJECTS + N_STATES      # 19 = combined one-hot width
K1 = N_TOK + 1                               # 20 (+ constant column carrying conv1 bias)

PAD_ROWS = 104     # B*HW=98 padded so the largest conv1 row shift (8) stays in-bounds

# Tap row-shifts in the flattened (b*49 + i*7 + j) "wide" layout.
SH1 = (0, 1, 7, 8)        # conv1 taps (dh*7 + dw)
SH2 = (0, 2, 14, 16)      # conv2/conv3 taps on the stride-2 pooled grid (14*dh + 2*dw)

L1 = 96                   # conv1 output slab rows kept (valid rows <= 89 needed)
LP = 72                   # conv2 output slab rows kept (valid rows <= 65 needed)

# Packed weight slab: (256, 128) f32, every sub-array at an 8-aligned row offset.
ROW_W1, ROW_W2, ROW_W3 = 0, 24, 40          # W1cat(20,64) / W2cat(16,64) / W3cat(16,128)
ROW_WL, ROW_WH1, ROW_WH2 = 56, 120, 152     # LSTM(64,128) / head1(32,64) / head2(64,8)
ROW_B2, ROW_B3, ROW_BL, ROW_BH1, ROW_BH2 = 216, 224, 232, 240, 248
SLAB_ROWS = 256

# Lane-dense (B, 128) output slab layout.
OUT_W = 128
LOGP_OFF, VAL_OFF, H_OFF, C_OFF = 0, 7, 8, 40


# ------------------------------- fused kernel --------------------------------
def _acmodel_kernel(img_ref, mem_ref, w_ref, out_ref):
    f32 = jnp.float32

    # ---- weights: static, 8-aligned slices of the single packed slab ---------
    w1c = w_ref[ROW_W1:ROW_W1 + K1, 0:4 * F2]                # (20,64) embeds+bias folded
    w2c = w_ref[ROW_W2:ROW_W2 + F2, 0:4 * F2]                # (16,64)
    w3c = w_ref[ROW_W3:ROW_W3 + F2, 0:4 * F_IMG]             # (16,128)
    wl = w_ref[ROW_WL:ROW_WL + 2 * F_IMG, 0:4 * F_IMG]       # (64,128) [Wih; Whh]
    wh1 = w_ref[ROW_WH1:ROW_WH1 + F_IMG, 0:2 * F_IMG]        # (32,64)  [actor1|critic1]
    wh2 = w_ref[ROW_WH2:ROW_WH2 + 2 * F_IMG, 0:N_ACT + 1]    # (64,8)   block-diag heads
    b2 = w_ref[ROW_B2:ROW_B2 + 1, 0:F2]
    b3 = w_ref[ROW_B3:ROW_B3 + 1, 0:F_IMG]
    bl = w_ref[ROW_BL:ROW_BL + 1, 0:4 * F_IMG]
    bh1 = w_ref[ROW_BH1:ROW_BH1 + 1, 0:2 * F_IMG]
    bh2 = w_ref[ROW_BH2:ROW_BH2 + 1, 0:N_ACT + 1]

    # ---- combined one-hot (token embeddings already folded into conv1) -------
    img = img_ref[...]                                        # (104,3) int32; rows>=98 pad
    iota = jax.lax.broadcasted_iota(jnp.int32, (PAD_ROWS, K1), 1)
    hit = ((iota == img[:, 1:2])                              # color  -> cols 0..5
           | (iota == img[:, 0:1] + N_COLORS)                 # object -> cols 6..16
           | (iota == img[:, 2:3] + N_COLORS + N_OBJECTS)     # state  -> cols 17..18
           | (iota == N_TOK))                                 # constant col -> conv1 bias
    onehot = jnp.where(hit, 1.0, 0.0).astype(f32)             # (104,20)

    # ---- conv1 2x2 (24->16): one batched matmul, 4 taps in lane groups -------
    y1 = jnp.dot(onehot, w1c, preferred_element_type=f32)     # (104,64)
    a1 = (y1[SH1[0]:SH1[0] + L1, 0:F2]
          + y1[SH1[1]:SH1[1] + L1, F2:2 * F2]
          + y1[SH1[2]:SH1[2] + L1, 2 * F2:3 * F2]
          + y1[SH1[3]:SH1[3] + L1, 3 * F2:4 * F2])
    r1 = jnp.maximum(a1, 0.0)                                 # (96,16) ReLU

    # ---- MaxPool2d(2,2) as two slab-wide maxima -------------------------------
    hm = jnp.maximum(r1[0:L1 - 1, :], r1[1:L1, :])            # (95,16) horizontal pair-max
    vm = jnp.maximum(hm[0:88, :], hm[7:95, :])                # (88,16) + vertical pair-max

    # ---- conv2 2x2 (16->16) ----------------------------------------------------
    y2 = jnp.dot(vm, w2c, preferred_element_type=f32)         # (88,64)
    a2 = (b2
          + y2[SH2[0]:SH2[0] + LP, 0:F2]
          + y2[SH2[1]:SH2[1] + LP, F2:2 * F2]
          + y2[SH2[2]:SH2[2] + LP, 2 * F2:3 * F2]
          + y2[SH2[3]:SH2[3] + LP, 3 * F2:4 * F2])
    r2 = jnp.maximum(a2, 0.0)                                 # (72,16)

    # ---- conv3 2x2 (16->32): batched matmul, tiny per-sample row gather -------
    y3 = jnp.dot(r2, w3c, preferred_element_type=f32)         # (72,128)

    def feat(base):                                           # (1,32) image feature
        return (y3[base + SH2[0]:base + SH2[0] + 1, 0:F_IMG]
                + y3[base + SH2[1]:base + SH2[1] + 1, F_IMG:2 * F_IMG]
                + y3[base + SH2[2]:base + SH2[2] + 1, 2 * F_IMG:3 * F_IMG]
                + y3[base + SH2[3]:base + SH2[3] + 1, 3 * F_IMG:4 * F_IMG])

    x = jnp.maximum(jnp.concatenate([feat(b * HW) for b in range(B)], axis=0) + b3,
                    0.0)                                      # (B,32)

    # ---- LSTMCell memory: one fused [x|h0] gate matmul, order (i,f,g,o) -------
    h0 = mem_ref[:, 0:F_IMG]
    c0 = mem_ref[:, F_IMG:2 * F_IMG]
    gates = jnp.dot(jnp.concatenate([x, h0], axis=1), wl,
                    preferred_element_type=f32) + bl          # (B,128)
    i_g = jax.nn.sigmoid(gates[:, 0:F_IMG])
    f_g = jax.nn.sigmoid(gates[:, F_IMG:2 * F_IMG])
    g_g = jnp.tanh(gates[:, 2 * F_IMG:3 * F_IMG])
    o_g = jax.nn.sigmoid(gates[:, 3 * F_IMG:4 * F_IMG])
    c1 = f_g * c0 + i_g * g_g
    h1 = o_g * jnp.tanh(c1)                                   # embedding

    # ---- fused actor/critic heads ----------------------------------------------
    hid = jnp.tanh(jnp.dot(h1, wh1, preferred_element_type=f32) + bh1)   # (B,64)
    o8 = jnp.dot(hid, wh2, preferred_element_type=f32) + bh2             # (B,8)
    logits = o8[:, 0:N_ACT]
    value = o8[:, N_ACT:N_ACT + 1]
    m = jnp.max(logits, axis=-1, keepdims=True)
    z = logits - m
    logp = z - jnp.log(jnp.sum(jnp.exp(z), axis=-1, keepdims=True))

    # ---- single unmasked lane-dense store ---------------------------------------
    out_ref[...] = jnp.concatenate(
        [logp, value, h1, c1, jnp.zeros((B, OUT_W - C_OFF - F_IMG), f32)], axis=1)


# --------------------------- deterministic parameters ------------------------
def init_params(key):
    ks = jax.random.split(key, 16)

    def normal(k, shape, scale=1.0):
        return scale * jax.random.normal(k, shape, jnp.float32)

    def row_norm(w):  # cfg.init_var: w /= sqrt(sum(w^2, dim=1, keepdim=True))
        return w / jnp.sqrt(jnp.sum(w * w, axis=1, keepdims=True))

    # Token embedding tables (normal(0,1), row-normalized). Combined into one
    # (19, 24) matrix matching torch.cat((color, object, state), dim=-1).
    col_t = row_norm(normal(ks[0], (N_COLORS, E_TOK)))
    obj_t = row_norm(normal(ks[1], (N_OBJECTS, E_TOK)))
    sta_t = row_norm(normal(ks[2], (N_STATES, E_TOK)))
    e_cat = jnp.zeros((N_TOK, C_IN), jnp.float32)
    e_cat = e_cat.at[0:N_COLORS, 0:E_TOK].set(col_t)
    e_cat = e_cat.at[N_COLORS:N_COLORS + N_OBJECTS, E_TOK:2 * E_TOK].set(obj_t)
    e_cat = e_cat.at[N_COLORS + N_OBJECTS:N_TOK, 2 * E_TOK:3 * E_TOK].set(sta_t)

    # Conv trunk: per-tap (kh,kw) weights stored (in, out), tap order (0,0),(0,1),(1,0),(1,1).
    w1 = normal(ks[3], (4, C_IN, F2), 0.1)
    b1 = normal(ks[4], (1, F2), 0.1)
    w2 = normal(ks[5], (4, F2, F2), 0.1)
    b2 = normal(ks[6], (1, F2), 0.1)
    w3 = normal(ks[7], (4, F2, F_IMG), 0.1)
    b3 = normal(ks[8], (1, F_IMG), 0.1)

    # Fold embeddings into conv1 and concatenate taps along lanes; the extra row
    # (constant one-hot column) carries the conv1 bias in tap-0's lane group only.
    w1cat = jnp.zeros((K1, 4 * F2), jnp.float32)
    for t in range(4):
        w1cat = w1cat.at[0:N_TOK, t * F2:(t + 1) * F2].set(e_cat @ w1[t])
    w1cat = w1cat.at[N_TOK, 0:F2].set(b1[0])
    w2cat = jnp.concatenate([w2[t] for t in range(4)], axis=1)    # (16, 64)
    w3cat = jnp.concatenate([w3[t] for t in range(4)], axis=1)    # (16, 128)

    # LSTMCell(F_IMG, F_IMG): gate order (i,f,g,o), stacked [Wih; Whh], pre-summed bias.
    wih = normal(ks[9], (F_IMG, 4 * F_IMG), F_IMG ** -0.5)
    whh = normal(ks[10], (F_IMG, 4 * F_IMG), F_IMG ** -0.5)
    wl = jnp.concatenate([wih, whh], axis=0)                      # (64, 128)
    bl = normal(ks[11], (1, 4 * F_IMG), F_IMG ** -0.5)

    # Actor / critic Linear layers: normal(0,1), row-normalized, zero bias, fused.
    def lin_w(k, din, dout):
        return row_norm(normal(k, (dout, din))).T                 # (in, out)

    wh1 = jnp.concatenate([lin_w(ks[12], F_IMG, F_IMG),
                           lin_w(ks[13], F_IMG, F_IMG)], axis=1)  # (32, 64)
    bh1 = jnp.zeros((1, 2 * F_IMG), jnp.float32)
    wh2 = jnp.zeros((2 * F_IMG, N_ACT + 1), jnp.float32)          # (64, 8) block-diag
    wh2 = wh2.at[0:F_IMG, 0:N_ACT].set(lin_w(ks[14], F_IMG, N_ACT))
    wh2 = wh2.at[F_IMG:, N_ACT:].set(lin_w(ks[15], F_IMG, 1))
    bh2 = jnp.zeros((1, N_ACT + 1), jnp.float32)

    # Pack everything into one (256, 128) f32 slab -> one HBM->VMEM DMA.
    slab = jnp.zeros((SLAB_ROWS, 128), jnp.float32)
    for off, arr in ((ROW_W1, w1cat), (ROW_W2, w2cat), (ROW_W3, w3cat),
                     (ROW_WL, wl), (ROW_WH1, wh1), (ROW_WH2, wh2),
                     (ROW_B2, b2), (ROW_B3, b3), (ROW_BL, bl),
                     (ROW_BH1, bh1), (ROW_BH2, bh2)):
        r, c = arr.shape
        slab = slab.at[off:off + r, 0:c].set(arr)
    return slab


# --------------------------------- forward -----------------------------------
@jax.jit
def forward(w_slab, image, memory):
    """image: (B, 7, 7, 3) int32 tokens; memory: (B, 2*F_IMG) float32.

    Returns (log_probs, value, new_memory); log_probs are the Categorical
    logits after log_softmax (dist = Categorical(logits=log_probs)).
    """
    img_flat = image.reshape(B * HW, 3).astype(jnp.int32)     # row = b*49 + i*7 + j
    img_pad = jnp.zeros((PAD_ROWS, 3), jnp.int32).at[0:B * HW, :].set(img_flat)

    vmem = pltpu.MemorySpace.VMEM
    slab = pl.pallas_call(
        _acmodel_kernel,
        out_shape=jax.ShapeDtypeStruct((B, OUT_W), jnp.float32),
        in_specs=[pl.BlockSpec(memory_space=vmem)] * 3,
        out_specs=pl.BlockSpec(memory_space=vmem),
    )(img_pad, memory, w_slab)

    log_probs = slab[:, LOGP_OFF:LOGP_OFF + N_ACT]
    value = slab[:, VAL_OFF]
    new_memory = slab[:, H_OFF:H_OFF + 2 * F_IMG]             # [h | c]
    return log_probs, value, new_memory


# ----------------------------------- main -------------------------------------
if __name__ == "__main__":
    key = jax.random.PRNGKey(0)
    kp, k_obj, k_col, k_sta, k_mem = jax.random.split(key, 5)
    w_slab = init_params(kp)

    obj_idx = jax.random.randint(k_obj, (B, H, W), 0, N_OBJECTS)
    col_idx = jax.random.randint(k_col, (B, H, W), 0, N_COLORS)
    sta_idx = jax.random.randint(k_sta, (B, H, W), 0, N_STATES)
    image = jnp.stack([obj_idx, col_idx, sta_idx], axis=-1).astype(jnp.int32)
    memory = jax.random.normal(k_mem, (B, 2 * F_IMG), jnp.float32)

    log_probs, value, new_memory = forward(w_slab, image, memory)
    jax.block_until_ready((log_probs, value, new_memory))

    assert log_probs.shape == (B, N_ACT)
    assert value.shape == (B,)
    assert new_memory.shape == (B, 2 * F_IMG)
    assert bool(jnp.all(jnp.isfinite(log_probs)))
    assert bool(jnp.all(jnp.isfinite(value)))
    assert bool(jnp.all(jnp.isfinite(new_memory)))
    # log_softmax rows must (approximately) normalize to 1.
    assert bool(jnp.all(jnp.abs(jnp.sum(jnp.exp(log_probs), axis=-1) - 1.0) < 1e-4))
    print("KERNEL_OK")
</pallas_src>

<mosaic_0001>
module attributes {stable_mosaic.version = 11 : i64} {
  func.func @_acmodel_kernel(%arg0: memref<104x3xi32, #tpu.memory_space<vmem>>, %arg1: memref<2x64xf32, #tpu.memory_space<vmem>>, %arg2: memref<256x128xf32, #tpu.memory_space<vmem>>, %arg3: memref<2x128xf32, #tpu.memory_space<vmem>>) attributes {dimension_semantics = [], scalar_prefetch = 0 : i64, scratch_operands = 0 : i64, tpu.core_type = #tpu.core_type<tc>} {
    %c0 = arith.constant 0 : index
    %c0_0 = arith.constant 0 : index
    %0 = vector.load %arg2[%c0, %c0_0] : memref<256x128xf32, #tpu.memory_space<vmem>>, vector<20x64xf32>
    %c24 = arith.constant 24 : index
    %c0_1 = arith.constant 0 : index
    %1 = vector.load %arg2[%c24, %c0_1] : memref<256x128xf32, #tpu.memory_space<vmem>>, vector<16x64xf32>
    %c40 = arith.constant 40 : index
    %c0_2 = arith.constant 0 : index
    %2 = vector.load %arg2[%c40, %c0_2] : memref<256x128xf32, #tpu.memory_space<vmem>>, vector<16x128xf32>
    %c56 = arith.constant 56 : index
    %c0_3 = arith.constant 0 : index
    %3 = vector.load %arg2[%c56, %c0_3] : memref<256x128xf32, #tpu.memory_space<vmem>>, vector<64x128xf32>
    %c120 = arith.constant 120 : index
    %c0_4 = arith.constant 0 : index
    %4 = vector.load %arg2[%c120, %c0_4] : memref<256x128xf32, #tpu.memory_space<vmem>>, vector<32x64xf32>
    %c152 = arith.constant 152 : index
    %c0_5 = arith.constant 0 : index
    %5 = vector.load %arg2[%c152, %c0_5] : memref<256x128xf32, #tpu.memory_space<vmem>>, vector<64x8xf32>
    %c216 = arith.constant 216 : index
    %c0_6 = arith.constant 0 : index
    %6 = vector.load %arg2[%c216, %c0_6] : memref<256x128xf32, #tpu.memory_space<vmem>>, vector<1x16xf32>
    %c224 = arith.constant 224 : index
    %c0_7 = arith.constant 0 : index
    %7 = vector.load %arg2[%c224, %c0_7] : memref<256x128xf32, #tpu.memory_space<vmem>>, vector<1x32xf32>
    %c232 = arith.constant 232 : index
    %c0_8 = arith.constant 0 : index
    %8 = vector.load %arg2[%c232, %c0_8] : memref<256x128xf32, #tpu.memory_space<vmem>>, vector<1x128xf32>
    %c240 = arith.constant 240 : index
    %c0_9 = arith.constant 0 : index
    %9 = vector.load %arg2[%c240, %c0_9] : memref<256x128xf32, #tpu.memory_space<vmem>>, vector<1x64xf32>
    %c248 = arith.constant 248 : index
    %c0_10 = arith.constant 0 : index
    %10 = vector.load %arg2[%c248, %c0_10] : memref<256x128xf32, #tpu.memory_space<vmem>>, vector<1x8xf32>
    %c0_11 = arith.constant 0 : index
    %c0_12 = arith.constant 0 : index
    %11 = vector.load %arg0[%c0_11, %c0_12] : memref<104x3xi32, #tpu.memory_space<vmem>>, vector<104x3xi32>
    %12 = tpu.iota {dimensions = array<i32: 1>} : vector<104x20xi32>
    %13 = vector.extract_strided_slice %11 {offsets = [0, 1], sizes = [104, 1], strides = [1, 1]} : vector<104x3xi32> to vector<104x1xi32>
    %14 = vector.broadcast %13 : vector<104x1xi32> to vector<104x20xi32>
    %15 = arith.cmpi eq, %12, %14 : vector<104x20xi32>
    %16 = vector.extract_strided_slice %11 {offsets = [0, 0], sizes = [104, 1], strides = [1, 1]} : vector<104x3xi32> to vector<104x1xi32>
    %c6_i32 = arith.constant 6 : i32
    %17 = vector.broadcast %c6_i32 : i32 to vector<104x1xi32>
    %18 = arith.addi %16, %17 : vector<104x1xi32>
    %19 = vector.broadcast %18 : vector<104x1xi32> to vector<104x20xi32>
    %20 = arith.cmpi eq, %12, %19 : vector<104x20xi32>
    %21 = arith.ori %15, %20 : vector<104x20xi1>
    %22 = vector.extract_strided_slice %11 {offsets = [0, 2], sizes = [104, 1], strides = [1, 1]} : vector<104x3xi32> to vector<104x1xi32>
    %c6_i32_13 = arith.constant 6 : i32
    %23 = vector.broadcast %c6_i32_13 : i32 to vector<104x1xi32>
    %24 = arith.addi %22, %23 : vector<104x1xi32>
    %c11_i32 = arith.constant 11 : i32
    %25 = vector.broadcast %c11_i32 : i32 to vector<104x1xi32>
    %26 = arith.addi %24, %25 : vector<104x1xi32>
    %27 = vector.broadcast %26 : vector<104x1xi32> to vector<104x20xi32>
    %28 = arith.cmpi eq, %12, %27 : vector<104x20xi32>
    %29 = arith.ori %21, %28 : vector<104x20xi1>
    %c19_i32 = arith.constant 19 : i32
    %30 = vector.broadcast %c19_i32 : i32 to vector<104x20xi32>
    %31 = arith.cmpi eq, %12, %30 : vector<104x20xi32>
    %32 = arith.ori %29, %31 : vector<104x20xi1>
    %cst = arith.constant 1.000000e+00 : f32
    %cst_14 = arith.constant 0.000000e+00 : f32
    %33 = vector.broadcast %cst : f32 to vector<104x20xf32>
    %34 = vector.broadcast %cst_14 : f32 to vector<104x20xf32>
    %35 = arith.select %32, %33, %34 : vector<104x20xi1>, vector<104x20xf32>
    %cst_15 = arith.constant dense<0.000000e+00> : vector<104x64xf32>
    %36 = tpu.matmul %35, %0, %cst_15 {dimension_numbers = #tpu.dot_dimension_numbers<[1], [0], [0], [1], [0, 0, 1, 1], [], []>} : vector<104x20xf32>, vector<20x64xf32>, vector<104x64xf32> -> vector<104x64xf32>
    %37 = vector.extract_strided_slice %36 {offsets = [0, 0], sizes = [96, 16], strides = [1, 1]} : vector<104x64xf32> to vector<96x16xf32>
    %38 = vector.extract_strided_slice %36 {offsets = [1, 16], sizes = [96, 16], strides = [1, 1]} : vector<104x64xf32> to vector<96x16xf32>
    %39 = arith.addf %37, %38 : vector<96x16xf32>
    %40 = vector.extract_strided_slice %36 {offsets = [7, 32], sizes = [96, 16], strides = [1, 1]} : vector<104x64xf32> to vector<96x16xf32>
    %41 = arith.addf %39, %40 : vector<96x16xf32>
    %42 = vector.extract_strided_slice %36 {offsets = [8, 48], sizes = [96, 16], strides = [1, 1]} : vector<104x64xf32> to vector<96x16xf32>
    %43 = arith.addf %41, %42 : vector<96x16xf32>
    %cst_16 = arith.constant 0.000000e+00 : f32
    %44 = vector.broadcast %cst_16 : f32 to vector<96x16xf32>
    %45 = arith.maximumf %43, %44 : vector<96x16xf32>
    %46 = vector.extract_strided_slice %45 {offsets = [0, 0], sizes = [95, 16], strides = [1, 1]} : vector<96x16xf32> to vector<95x16xf32>
    %47 = vector.extract_strided_slice %45 {offsets = [1, 0], sizes = [95, 16], strides = [1, 1]} : vector<96x16xf32> to vector<95x16xf32>
    %48 = arith.maximumf %46, %47 : vector<95x16xf32>
    %49 = vector.extract_strided_slice %48 {offsets = [0, 0], sizes = [88, 16], strides = [1, 1]} : vector<95x16xf32> to vector<88x16xf32>
    %50 = vector.extract_strided_slice %48 {offsets = [7, 0], sizes = [88, 16], strides = [1, 1]} : vector<95x16xf32> to vector<88x16xf32>
    %51 = arith.maximumf %49, %50 : vector<88x16xf32>
    %cst_17 = arith.constant dense<0.000000e+00> : vector<88x64xf32>
    %52 = tpu.matmul %51, %1, %cst_17 {dimension_numbers = #tpu.dot_dimension_numbers<[1], [0], [0], [1], [0, 0, 1, 1], [], []>} : vector<88x16xf32>, vector<16x64xf32>, vector<88x64xf32> -> vector<88x64xf32>
    %53 = vector.extract_strided_slice %52 {offsets = [0, 0], sizes = [72, 16], strides = [1, 1]} : vector<88x64xf32> to vector<72x16xf32>
    %54 = vector.broadcast %6 : vector<1x16xf32> to vector<72x16xf32>
    %55 = arith.addf %54, %53 : vector<72x16xf32>
    %56 = vector.extract_strided_slice %52 {offsets = [2, 16], sizes = [72, 16], strides = [1, 1]} : vector<88x64xf32> to vector<72x16xf32>
    %57 = arith.addf %55, %56 : vector<72x16xf32>
    %58 = vector.extract_strided_slice %52 {offsets = [14, 32], sizes = [72, 16], strides = [1, 1]} : vector<88x64xf32> to vector<72x16xf32>
    %59 = arith.addf %57, %58 : vector<72x16xf32>
    %60 = vector.extract_strided_slice %52 {offsets = [16, 48], sizes = [72, 16], strides = [1, 1]} : vector<88x64xf32> to vector<72x16xf32>
    %61 = arith.addf %59, %60 : vector<72x16xf32>
    %cst_18 = arith.constant 0.000000e+00 : f32
    %62 = vector.broadcast %cst_18 : f32 to vector<72x16xf32>
    %63 = arith.maximumf %61, %62 : vector<72x16xf32>
    %cst_19 = arith.constant dense<0.000000e+00> : vector<72x128xf32>
    %64 = tpu.matmul %63, %2, %cst_19 {dimension_numbers = #tpu.dot_dimension_numbers<[1], [0], [0], [1], [0, 0, 1, 1], [], []>} : vector<72x16xf32>, vector<16x128xf32>, vector<72x128xf32> -> vector<72x128xf32>
    %65 = vector.extract_strided_slice %64 {offsets = [0, 0], sizes = [1, 32], strides = [1, 1]} : vector<72x128xf32> to vector<1x32xf32>
    %66 = vector.extract_strided_slice %64 {offsets = [2, 32], sizes = [1, 32], strides = [1, 1]} : vector<72x128xf32> to vector<1x32xf32>
    %67 = arith.addf %65, %66 : vector<1x32xf32>
    %68 = vector.extract_strided_slice %64 {offsets = [14, 64], sizes = [1, 32], strides = [1, 1]} : vector<72x128xf32> to vector<1x32xf32>
    %69 = arith.addf %67, %68 : vector<1x32xf32>
    %70 = vector.extract_strided_slice %64 {offsets = [16, 96], sizes = [1, 32], strides = [1, 1]} : vector<72x128xf32> to vector<1x32xf32>
    %71 = arith.addf %69, %70 : vector<1x32xf32>
    %72 = vector.extract_strided_slice %64 {offsets = [49, 0], sizes = [1, 32], strides = [1, 1]} : vector<72x128xf32> to vector<1x32xf32>
    %73 = vector.extract_strided_slice %64 {offsets = [51, 32], sizes = [1, 32], strides = [1, 1]} : vector<72x128xf32> to vector<1x32xf32>
    %74 = arith.addf %72, %73 : vector<1x32xf32>
    %75 = vector.extract_strided_slice %64 {offsets = [63, 64], sizes = [1, 32], strides = [1, 1]} : vector<72x128xf32> to vector<1x32xf32>
    %76 = arith.addf %74, %75 : vector<1x32xf32>
    %77 = vector.extract_strided_slice %64 {offsets = [65, 96], sizes = [1, 32], strides = [1, 1]} : vector<72x128xf32> to vector<1x32xf32>
    %78 = arith.addf %76, %77 : vector<1x32xf32>
    %79 = tpu.concatenate %71, %78 in 0 : vector<1x32xf32>, vector<1x32xf32> -> vector<2x32xf32>
    %80 = vector.broadcast %7 : vector<1x32xf32> to vector<2x32xf32>
    %81 = arith.addf %79, %80 : vector<2x32xf32>
    %cst_20 = arith.constant 0.000000e+00 : f32
    %82 = vector.broadcast %cst_20 : f32 to vector<2x32xf32>
    %83 = arith.maximumf %81, %82 : vector<2x32xf32>
    %c0_21 = arith.constant 0 : index
    %c0_22 = arith.constant 0 : index
    %84 = vector.load %arg1[%c0_21, %c0_22] : memref<2x64xf32, #tpu.memory_space<vmem>>, vector<2x32xf32>
    %c0_23 = arith.constant 0 : index
    %c32 = arith.constant 32 : index
    %85 = vector.load %arg1[%c0_23, %c32] : memref<2x64xf32, #tpu.memory_space<vmem>>, vector<2x32xf32>
    %86 = tpu.concatenate %83, %84 in 1 : vector<2x32xf32>, vector<2x32xf32> -> vector<2x64xf32>
    %cst_24 = arith.constant dense<0.000000e+00> : vector<2x128xf32>
    %87 = tpu.matmul %86, %3, %cst_24 {dimension_numbers = #tpu.dot_dimension_numbers<[1], [0], [0], [1], [0, 0, 1, 1], [], []>} : vector<2x64xf32>, vector<64x128xf32>, vector<2x128xf32> -> vector<2x128xf32>
    %88 = vector.broadcast %8 : vector<1x128xf32> to vector<2x128xf32>
    %89 = arith.addf %87, %88 : vector<2x128xf32>
    %90 = vector.extract_strided_slice %89 {offsets = [0, 0], sizes = [2, 32], strides = [1, 1]} : vector<2x128xf32> to vector<2x32xf32>
    %91 = arith.negf %90 : vector<2x32xf32>
    %92 = math.exp %91 : vector<2x32xf32>
    %cst_25 = arith.constant 1.000000e+00 : f32
    %93 = vector.broadcast %cst_25 : f32 to vector<2x32xf32>
    %94 = arith.addf %93, %92 : vector<2x32xf32>
    %95 = arith.divf %93, %94 : vector<2x32xf32>
    %96 = vector.extract_strided_slice %89 {offsets = [0, 32], sizes = [2, 32], strides = [1, 1]} : vector<2x128xf32> to vector<2x32xf32>
    %97 = arith.negf %96 : vector<2x32xf32>
    %98 = math.exp %97 : vector<2x32xf32>
    %cst_26 = arith.constant 1.000000e+00 : f32
    %99 = vector.broadcast %cst_26 : f32 to vector<2x32xf32>
    %100 = arith.addf %99, %98 : vector<2x32xf32>
    %101 = arith.divf %99, %100 : vector<2x32xf32>
    %102 = vector.extract_strided_slice %89 {offsets = [0, 64], sizes = [2, 32], strides = [1, 1]} : vector<2x128xf32> to vector<2x32xf32>
    %103 = math.tanh %102 : vector<2x32xf32>
    %104 = vector.extract_strided_slice %89 {offsets = [0, 96], sizes = [2, 32], strides = [1, 1]} : vector<2x128xf32> to vector<2x32xf32>
    %105 = arith.negf %104 : vector<2x32xf32>
    %106 = math.exp %105 : vector<2x32xf32>
    %cst_27 = arith.constant 1.000000e+00 : f32
    %107 = vector.broadcast %cst_27 : f32 to vector<2x32xf32>
    %108 = arith.addf %107, %106 : vector<2x32xf32>
    %109 = arith.divf %107, %108 : vector<2x32xf32>
    %110 = arith.mulf %101, %85 : vector<2x32xf32>
    %111 = arith.mulf %95, %103 : vector<2x32xf32>
    %112 = arith.addf %110, %111 : vector<2x32xf32>
    %113 = math.tanh %112 : vector<2x32xf32>
    %114 = arith.mulf %109, %113 : vector<2x32xf32>
    %cst_28 = arith.constant dense<0.000000e+00> : vector<2x64xf32>
    %115 = tpu.matmul %114, %4, %cst_28 {dimension_numbers = #tpu.dot_dimension_numbers<[1], [0], [0], [1], [0, 0, 1, 1], [], []>} : vector<2x32xf32>, vector<32x64xf32>, vector<2x64xf32> -> vector<2x64xf32>
    %116 = vector.broadcast %9 : vector<1x64xf32> to vector<2x64xf32>
    %117 = arith.addf %115, %116 : vector<2x64xf32>
    %118 = math.tanh %117 : vector<2x64xf32>
    %cst_29 = arith.constant dense<0.000000e+00> : vector<2x8xf32>
    %119 = tpu.matmul %118, %5, %cst_29 {dimension_numbers = #tpu.dot_dimension_numbers<[1], [0], [0], [1], [0, 0, 1, 1], [], []>} : vector<2x64xf32>, vector<64x8xf32>, vector<2x8xf32> -> vector<2x8xf32>
    %120 = vector.broadcast %10 : vector<1x8xf32> to vector<2x8xf32>
    %121 = arith.addf %119, %120 : vector<2x8xf32>
    %122 = vector.extract_strided_slice %121 {offsets = [0, 0], sizes = [2, 7], strides = [1, 1]} : vector<2x8xf32> to vector<2x7xf32>
    %123 = vector.extract_strided_slice %121 {offsets = [0, 7], sizes = [2, 1], strides = [1, 1]} : vector<2x8xf32> to vector<2x1xf32>
    %cst_30 = arith.constant dense<0xFF800000> : vector<2xf32>
    %124 = vector.multi_reduction <maximumf>, %122, %cst_30 [1] : vector<2x7xf32> to vector<2xf32>
    %125 = vector.shape_cast %124 : vector<2xf32> to vector<2x1xf32>
    %126 = vector.broadcast %125 : vector<2x1xf32> to vector<2x7xf32>
    %127 = arith.subf %122, %126 : vector<2x7xf32>
    %128 = math.exp %127 : vector<2x7xf32>
    %cst_31 = arith.constant dense<0.000000e+00> : vector<2xf32>
    %129 = vector.multi_reduction <add>, %128, %cst_31 [1] : vector<2x7xf32> to vector<2xf32>
    %130 = vector.shape_cast %129 : vector<2xf32> to vector<2x1xf32>
    %131 = math.log %130 : vector<2x1xf32>
    %132 = vector.broadcast %131 : vector<2x1xf32> to vector<2x7xf32>
    %133 = arith.subf %127, %132 : vector<2x7xf32>
    %cst_32 = arith.constant 0.000000e+00 : f32
    %134 = vector.broadcast %cst_32 : f32 to vector<2x56xf32>
    %135 = tpu.concatenate %133, %123, %114, %112, %134 in 1 : vector<2x7xf32>, vector<2x1xf32>, vector<2x32xf32>, vector<2x32xf32>, vector<2x56xf32> -> vector<2x128xf32>
    %c0_33 = arith.constant 0 : index
    %c0_34 = arith.constant 0 : index
    %136 = vector.load %arg3[%c0_33, %c0_34] : memref<2x128xf32, #tpu.memory_space<vmem>>, vector<2x128xf32>
    tpu.vector_store %arg3[%c0_33, %c0_34], %135 {strides = array<i32>} : memref<2x128xf32, #tpu.memory_space<vmem>>, vector<2x128xf32>,
    return
  }
}

</mosaic_0001>

<llo_original>
// kernel: forward.1
$region0: #{forward.1}
  #allocation0 [shape = 'u32[]', space=smem, size = 0x4, offset = 0x4, fixed_abs, tag = 'smem constant byte address 0x4 - core index']
  #allocation1 [shape = 'u32[144,128]{1,0:T(1,128)}', space=vmem, size = 0x12000, scoped, tag = 'internal scratch']
  %s0 = inlined_call_operand.vmem [shape: s32[104,3], index: 0, kind: input, shape index: {}]
  %s1 = inlined_call_operand.vmem [shape: f32[2,64], index: 1, kind: input, shape index: {}]
  %s2 = inlined_call_operand.vmem [shape: f32[256,128], index: 2, kind: input, shape index: {}]
  %s3 = inlined_call_operand.vmem [shape: f32[2,128], index: 3, kind: output, shape index: {}]
  %s4 = sld [smem:[#allocation0]]
  $region22: #{forward.1} parent=0
    _
  %s6 = ssub.s32 1, %s4
  %s7 = scalar_select 0, %s6, %s4
  // Predicated region
  $region2: #{forward.1} parent=0 // pred_check
    _
  $region3: #{forward.1} parent=0 // pred_check_branch
    %9 = sbr.rel (0) target = $region5
  $region4: #{forward.1} parent=0 // pred_region
    _
  $region5: #{forward.1} parent=0 // pred_fallthru
    _
  // Predicated region
  $region6: #{forward.1} parent=0 // pred_check
    _
  $region7: #{forward.1} parent=0 // pred_check_branch
    %11 = sbr.rel (0) target = $region9
  $region8: #{forward.1} parent=0 // pred_region
    _
  $region9: #{forward.1} parent=0 // pred_fallthru
    _
  // Predicated region
  $region10: #{forward.1} parent=0 // pred_check
    _
  $region11: #{forward.1} parent=0 // pred_check_branch
    %13 = sbr.rel (0) target = $region13
  $region12: #{forward.1} parent=0 // pred_region
    _
  $region13: #{forward.1} parent=0 // pred_fallthru
    _
  %v14 = vld [vmem:[%s2] sm:$0xff]
  %v15 = vld [vmem:[%s2 + $0x8] sm:$0xff]
  %v16 = vld [vmem:[%s2 + $0x10] sm:$0xf]
  %v17 = vld [vmem:[%s2 + $0x18] sm:$0xff]
  %v18 = vld [vmem:[%s2 + $0x20] sm:$0xff]
  %v19 = vld [vmem:[%s2 + $0x28] sm:$0xff]
  %v20 = vld [vmem:[%s2 + $0x30] sm:$0xff]
  %v21 = vld [vmem:[%s2 + $0x38] sm:$0xff]
  %v22 = vld [vmem:[%s2 + $0x40] sm:$0xff]
  %v23 = vld [vmem:[%s2 + $0x48] sm:$0xff]
  %v24 = vld [vmem:[%s2 + $0x50] sm:$0xff]
  %v25 = vld [vmem:[%s2 + $0x58] sm:$0xff]
  %v26 = vld [vmem:[%s2 + $0x60] sm:$0xff]
  %v27 = vld [vmem:[%s2 + $0x68] sm:$0xff]
  %v28 = vld [vmem:[%s2 + $0x70] sm:$0xff]
  %v29 = vld [vmem:[%s2 + $0x78] sm:$0xff]
  %v30 = vld [vmem:[%s2 + $0x80] sm:$0xff]
  %v31 = vld [vmem:[%s2 + $0x88] sm:$0xff]
  %v32 = vld [vmem:[%s2 + $0x90] sm:$0xff]
  %v33 = vld [vmem:[%s2 + $0x98] sm:$0xff]
  %v34 = vld [vmem:[%s2 + $0xa0] sm:$0xff]
  %v35 = vld [vmem:[%s2 + $0xa8] sm:$0xff]
  %v36 = vld [vmem:[%s2 + $0xb0] sm:$0xff]
  %v37 = vld [vmem:[%s2 + $0xb8] sm:$0xff]
  %v38 = vld [vmem:[%s2 + $0xc0] sm:$0xff]
  %v39 = vld [vmem:[%s2 + $0xc8] sm:$0xff]
  %v40 = vld [vmem:[%s2 + $0xd0] sm:$0xff]
  %v41 = vld [vmem:[%s2 + $0xd8] sm:$0x1]
  %v42 = vld [vmem:[%s2 + $0xe0] sm:$0x1]
  %v43 = vld [vmem:[%s2 + $0xe8] sm:$0x1]
  %v44 = vld [vmem:[%s2 + $0xf0] sm:$0x1]
  %v45 = vld [vmem:[%s2 + $0xf8] sm:$0x1]
  %v46 = vld [vmem:[%s0] sm:$0xff]
  %v47 = vld [vmem:[%s0 + $0x8] sm:$0xff]
  %v48 = vld [vmem:[%s0 + $0x10] sm:$0xff]
  %v49 = vld [vmem:[%s0 + $0x18] sm:$0xff]
  %v50 = vld [vmem:[%s0 + $0x20] sm:$0xff]
  %v51 = vld [vmem:[%s0 + $0x28] sm:$0xff]
  %v52 = vld [vmem:[%s0 + $0x30] sm:$0xff]
  %v53 = vld [vmem:[%s0 + $0x38] sm:$0xff]
  %v54 = vld [vmem:[%s0 + $0x40] sm:$0xff]
  %v55 = vld [vmem:[%s0 + $0x48] sm:$0xff]
  %v56 = vld [vmem:[%s0 + $0x50] sm:$0xff]
  %v57 = vld [vmem:[%s0 + $0x58] sm:$0xff]
  %v58 = vld [vmem:[%s0 + $0x60] sm:$0xff]
  %v59 = vlaneseq
  %v60 = vand.u32 %v59, 127
  %61 = vset.pattern.permute.xlu0 1
  %62 = vperm.xlu0 %61, %v46
  %v63 = vpop.permute.xlu0 %62
  %64 = vset.pattern.permute.xlu0 1
  %65 = vperm.xlu0 %64, %v47
  %v66 = vpop.permute.xlu0 %65
  %67 = vset.pattern.permute.xlu0 1
  %68 = vperm.xlu0 %67, %v48
  %v69 = vpop.permute.xlu0 %68
  %70 = vset.pattern.permute.xlu0 1
  %71 = vperm.xlu0 %70, %v49
  %v72 = vpop.permute.xlu0 %71
  %73 = vset.pattern.permute.xlu0 1
  %74 = vperm.xlu0 %73, %v50
  %v75 = vpop.permute.xlu0 %74
  %76 = vset.pattern.permute.xlu0 1
  %77 = vperm.xlu0 %76, %v51
  %v78 = vpop.permute.xlu0 %77
  %79 = vset.pattern.permute.xlu0 1
  %80 = vperm.xlu0 %79, %v52
  %v81 = vpop.permute.xlu0 %80
  %82 = vset.pattern.permute.xlu0 1
  %83 = vperm.xlu0 %82, %v53
  %v84 = vpop.permute.xlu0 %83
  %85 = vset.pattern.permute.xlu0 1
  %86 = vperm.xlu0 %85, %v54
  %v87 = vpop.permute.xlu0 %86
  %88 = vset.pattern.permute.xlu0 1
  %89 = vperm.xlu0 %88, %v55
  %v90 = vpop.permute.xlu0 %89
  %91 = vset.pattern.permute.xlu0 1
  %92 = vperm.xlu0 %91, %v56
  %v93 = vpop.permute.xlu0 %92
  %94 = vset.pattern.permute.xlu0 1
  %95 = vperm.xlu0 %94, %v57
  %v96 = vpop.permute.xlu0 %95
  %97 = vset.pattern.permute.xlu0 1
  %98 = vperm.xlu0 %97, %v58
  %v99 = vpop.permute.xlu0 %98
  %vm100 = vcmp.eq.s32.totalorder %v60, %v63
  %vm101 = vcmp.eq.s32.totalorder %v60, %v66
  %vm102 = vcmp.eq.s32.totalorder %v60, %v69
  %vm103 = vcmp.eq.s32.totalorder %v60, %v72
  %vm104 = vcmp.eq.s32.totalorder %v60, %v75
  %vm105 = vcmp.eq.s32.totalorder %v60, %v78
  %vm106 = vcmp.eq.s32.totalorder %v60, %v81
  %vm107 = vcmp.eq.s32.totalorder %v60, %v84
  %vm108 = vcmp.eq.s32.totalorder %v60, %v87
  %vm109 = vcmp.eq.s32.totalorder %v60, %v90
  %vm110 = vcmp.eq.s32.totalorder %v60, %v93
  %vm111 = vcmp.eq.s32.totalorder %v60, %v96
  %vm112 = vcmp.eq.s32.totalorder %v60, %v99
  %v113 = vadd.s32 %v46, 6
  %v114 = vadd.s32 %v47, 6
  %v115 = vadd.s32 %v48, 6
  %v116 = vadd.s32 %v49, 6
  %v117 = vadd.s32 %v50, 6
  %v118 = vadd.s32 %v51, 6
  %v119 = vadd.s32 %v52, 6
  %v120 = vadd.s32 %v53, 6
  %v121 = vadd.s32 %v54, 6
  %v122 = vadd.s32 %v55, 6
  %v123 = vadd.s32 %v56, 6
  %v124 = vadd.s32 %v57, 6
  %v125 = vadd.s32 %v58, 6
  %126 = vset.pattern.permute.xlu0 0
  %127 = vperm.xlu0 %126, %v113
  %v128 = vpop.permute.xlu0 %127
  %129 = vset.pattern.permute.xlu0 0
  %130 = vperm.xlu0 %129, %v114
  %v131 = vpop.permute.xlu0 %130
  %132 = vset.pattern.permute.xlu0 0
  %133 = vperm.xlu0 %132, %v115
  %v134 = vpop.permute.xlu0 %133
  %135 = vset.pattern.permute.xlu0 0
  %136 = vperm.xlu0 %135, %v116
  %v137 = vpop.permute.xlu0 %136
  %138 = vset.pattern.permute.xlu0 0
  %139 = vperm.xlu0 %138, %v117
  %v140 = vpop.permute.xlu0 %139
  %141 = vset.pattern.permute.xlu0 0
  %142 = vperm.xlu0 %141, %v118
  %v143 = vpop.permute.xlu0 %142
  %144 = vset.pattern.permute.xlu0 0
  %145 = vperm.xlu0 %144, %v119
  %v146 = vpop.permute.xlu0 %145
  %147 = vset.pattern.permute.xlu0 0
  %148 = vperm.xlu0 %147, %v120
  %v149 = vpop.permute.xlu0 %148
  %150 = vset.pattern.permute.xlu0 0
  %151 = vperm.xlu0 %150, %v121
  %v152 = vpop.permute.xlu0 %151
  %153 = vset.pattern.permute.xlu0 0
  %154 = vperm.xlu0 %153, %v122
  %v155 = vpop.permute.xlu0 %154
  %156 = vset.pattern.permute.xlu0 0
  %157 = vperm.xlu0 %156, %v123
  %v158 = vpop.permute.xlu0 %157
  %159 = vset.pattern.permute.xlu0 0
  %160 = vperm.xlu0 %159, %v124
  %v161 = vpop.permute.xlu0 %160
  %162 = vset.pattern.permute.xlu0 0
  %163 = vperm.xlu0 %162, %v125
  %v164 = vpop.permute.xlu0 %163
  %vm165 = vcmp.eq.s32.totalorder %v60, %v128
  %vm166 = vcmp.eq.s32.totalorder %v60, %v131
  %vm167 = vcmp.eq.s32.totalorder %v60, %v134
  %vm168 = vcmp.eq.s32.totalorder %v60, %v137
  %vm169 = vcmp.eq.s32.totalorder %v60, %v140
  %vm170 = vcmp.eq.s32.totalorder %v60, %v143
  %vm171 = vcmp.eq.s32.totalorder %v60, %v146
  %vm172 = vcmp.eq.s32.totalorder %v60, %v149
  %vm173 = vcmp.eq.s32.totalorder %v60, %v152
  %vm174 = vcmp.eq.s32.totalorder %v60, %v155
  %vm175 = vcmp.eq.s32.totalorder %v60, %v158
  %vm176 = vcmp.eq.s32.totalorder %v60, %v161
  %vm177 = vcmp.eq.s32.totalorder %v60, %v164
  %vm178 = vmor %vm100, %vm165
  %vm179 = vmor %vm101, %vm166
  %vm180 = vmor %vm102, %vm167
  %vm181 = vmor %vm103, %vm168
  %vm182 = vmor %vm104, %vm169
  %vm183 = vmor %vm105, %vm170
  %vm184 = vmor %vm106, %vm171
  %vm185 = vmor %vm107, %vm172
  %vm186 = vmor %vm108, %vm173
  %vm187 = vmor %vm109, %vm174
  %vm188 = vmor %vm110, %vm175
  %vm189 = vmor %vm111, %vm176
  %vm190 = vmor %vm112, %vm177
  %v191 = vadd.s32 %v113, 11
  %v192 = vadd.s32 %v114, 11
  %v193 = vadd.s32 %v115, 11
  %v194 = vadd.s32 %v116, 11
  %v195 = vadd.s32 %v117, 11
  %v196 = vadd.s32 %v118, 11
  %v197 = vadd.s32 %v119, 11
  %v198 = vadd.s32 %v120, 11
  %v199 = vadd.s32 %v121, 11
  %v200 = vadd.s32 %v122, 11
  %v201 = vadd.s32 %v123, 11
  %v202 = vadd.s32 %v124, 11
  %v203 = vadd.s32 %v125, 11
  %204 = vset.pattern.permute.xlu0 2
  %205 = vperm.xlu0 %204, %v191
  %v206 = vpop.permute.xlu0 %205
  %207 = vset.pattern.permute.xlu0 2
  %208 = vperm.xlu0 %207, %v192
  %v209 = vpop.permute.xlu0 %208
  %210 = vset.pattern.permute.xlu0 2
  %211 = vperm.xlu0 %210, %v193
  %v212 = vpop.permute.xlu0 %211
  %213 = vset.pattern.permute.xlu0 2
  %214 = vperm.xlu0 %213, %v194
  %v215 = vpop.permute.xlu0 %214
  %216 = vset.pattern.permute.xlu0 2
  %217 = vperm.xlu0 %216, %v195
  %v218 = vpop.permute.xlu0 %217
  %219 = vset.pattern.permute.xlu0 2
  %220 = vperm.xlu0 %219, %v196
  %v221 = vpop.permute.xlu0 %220
  %222 = vset.pattern.permute.xlu0 2
  %223 = vperm.xlu0 %222, %v197
  %v224 = vpop.permute.xlu0 %223
  %225 = vset.pattern.permute.xlu0 2
  %226 = vperm.xlu0 %225, %v198
  %v227 = vpop.permute.xlu0 %226
  %228 = vset.pattern.permute.xlu0 2
  %229 = vperm.xlu0 %228, %v199
  %v230 = vpop.permute.xlu0 %229
  %231 = vset.pattern.permute.xlu0 2
  %232 = vperm.xlu0 %231, %v200
  %v233 = vpop.permute.xlu0 %232
  %234 = vset.pattern.permute.xlu0 2
  %235 = vperm.xlu0 %234, %v201
  %v236 = vpop.permute.xlu0 %235
  %237 = vset.pattern.permute.xlu0 2
  %238 = vperm.xlu0 %237, %v202
  %v239 = vpop.permute.xlu0 %238
  %240 = vset.pattern.permute.xlu0 2
  %241 = vperm.xlu0 %240, %v203
  %v242 = vpop.permute.xlu0 %241
  %vm243 = vcmp.eq.s32.totalorder %v60, %v206
  %vm244 = vcmp.eq.s32.totalorder %v60, %v209
  %vm245 = vcmp.eq.s32.totalorder %v60, %v212
  %vm246 = vcmp.eq.s32.totalorder %v60, %v215
  %vm247 = vcmp.eq.s32.totalorder %v60, %v218
  %vm248 = vcmp.eq.s32.totalorder %v60, %v221
  %vm249 = vcmp.eq.s32.totalorder %v60, %v224
  %vm250 = vcmp.eq.s32.totalorder %v60, %v227
  %vm251 = vcmp.eq.s32.totalorder %v60, %v230
  %vm252 = vcmp.eq.s32.totalorder %v60, %v233
  %vm253 = vcmp.eq.s32.totalorder %v60, %v236
  %vm254 = vcmp.eq.s32.totalorder %v60, %v239
  %vm255 = vcmp.eq.s32.totalorder %v60, %v242
  %vm256 = vmor %vm178, %vm243
  %vm257 = vmor %vm179, %vm244
  %vm258 = vmor %vm180, %vm245
  %vm259 = vmor %vm181, %vm246
  %vm260 = vmor %vm182, %vm247
  %vm261 = vmor %vm183, %vm248
  %vm262 = vmor %vm184, %vm249
  %vm263 = vmor %vm185, %vm250
  %vm264 = vmor %vm186, %vm251
  %vm265 = vmor %vm187, %vm252
  %vm266 = vmor %vm188, %vm253
  %vm267 = vmor %vm189, %vm254
  %vm268 = vmor %vm190, %vm255
  %vm269 = vcmp.eq.s32.totalorder %v60, 19
  %vm270 = vmor %vm256, %vm269
  %vm271 = vmor %vm257, %vm269
  %vm272 = vmor %vm258, %vm269
  %vm273 = vmor %vm259, %vm269
  %vm274 = vmor %vm260, %vm269
  %vm275 = vmor %vm261, %vm269
  %vm276 = vmor %vm262, %vm269
  %vm277 = vmor %vm263, %vm269
  %vm278 = vmor %vm264, %vm269
  %vm279 = vmor %vm265, %vm269
  %vm280 = vmor %vm266, %vm269
  %vm281 = vmor %vm267, %vm269
  %vm282 = vmor %vm268, %vm269
  %v283 = vsel %vm270, 1.0, 0.0
  %v284 = vsel %vm271, 1.0, 0.0
  %v285 = vsel %vm272, 1.0, 0.0
  %v286 = vsel %vm273, 1.0, 0.0
  %v287 = vsel %vm274, 1.0, 0.0
  %v288 = vsel %vm275, 1.0, 0.0
  %v289 = vsel %vm276, 1.0, 0.0
  %v290 = vsel %vm277, 1.0, 0.0
  %v291 = vsel %vm278, 1.0, 0.0
  %v292 = vsel %vm279, 1.0, 0.0
  %v293 = vsel %vm280, 1.0, 0.0
  %v294 = vsel %vm281, 1.0, 0.0
  %v295 = vsel %vm282, 1.0, 0.0
  %vm296 = vcmask 162816
  %v298 = vsel %vm296, %v283, 0
  %v301 = vsel %vm296, %v284, 0
  %v304 = vsel %vm296, %v285, 0
  %v307 = vsel %vm296, %v286, 0
  %v310 = vsel %vm296, %v287, 0
  %v313 = vsel %vm296, %v288, 0
  %v316 = vsel %vm296, %v289, 0
  %v319 = vsel %vm296, %v290, 0
  %v322 = vsel %vm296, %v291, 0
  %v325 = vsel %vm296, %v292, 0
  %v328 = vsel %vm296, %v293, 0
  %v331 = vsel %vm296, %v294, 0
  %v334 = vsel %vm296, %v295, 0
  %vm336 = vcmask 1043456
  %v338 = vsel %vm336, %v16, 0
  %340 = vmatprep.subr.mxu0 0.0
  %341 = vmatpush1.msra.mxu0 0.0
  %342 = vmatprep.subr.mxu0 0.0
  %343 = vmatpush1.msra.mxu0 0.0
  %344 = vmatprep.subr.mxu0 0.0
  %345 = vmatpush1.msra.mxu0 0.0
  %346 = vmatprep.subr.mxu0 0.0
  %347 = vmatpush1.msra.mxu0 0.0
  %348 = vmatprep.subr.mxu0 0.0
  %349 = vmatpush1.msra.mxu0 0.0
  %350 = vmatprep.subr.mxu0 0.0
  %351 = vmatpush1.msra.mxu0 0.0
  %352 = vmatprep.subr.mxu0 0.0
  %353 = vmatpush1.msra.mxu0 0.0
  %354 = vmatprep.subr.mxu0 0.0
  %355 = vmatpush1.msra.mxu0 0.0
  %356 = vmatprep.subr.mxu0 0.0
  %357 = vmatpush1.msra.mxu0 0.0
  %358 = vmatprep.subr.mxu0 0.0
  %359 = vmatpush1.msra.mxu0 0.0
  %360 = vmatprep.subr.mxu0 0.0
  %361 = vmatpush1.msra.mxu0 0.0
  %362 = vmatprep.subr.mxu0 0.0
  %363 = vmatpush1.msra.mxu0 0.0
  %364 = vmatprep.subr.mxu0 0.0
  %365 = vmatpush1.msra.mxu0 0.0
  %366 = vmatprep.subr.mxu0 0.0
  %367 = vmatpush1.msra.mxu0 %v338
  %368 = vmatprep.subr.mxu0 0.0
  %369 = vmatpush1.msra.mxu0 %v15
  %370 = vmatprep.subr.mxu0 0.0
  %371 = vmatpush1.msra.mxu0 %v14
  %372 = vmatprep.subr.mxu0 0.0
  %373 = vmatpush2.msra.mxu0 0.0
  %374 = vmatprep.subr.mxu0 0.0
  %375 = vmatpush2.msra.mxu0 0.0
  %376 = vmatprep.subr.mxu0 0.0
  %377 = vmatpush2.msra.mxu0 0.0
  %378 = vmatprep.subr.mxu0 0.0
  %379 = vmatpush2.msra.mxu0 0.0
  %380 = vmatprep.subr.mxu0 0.0
  %381 = vmatpush2.msra.mxu0 0.0
  %382 = vmatprep.subr.mxu0 0.0
  %383 = vmatpush2.msra.mxu0 0.0
  %384 = vmatprep.subr.mxu0 0.0
  %385 = vmatpush2.msra.mxu0 0.0
  %386 = vmatprep.subr.mxu0 0.0
  %387 = vmatpush2.msra.mxu0 0.0
  %388 = vmatprep.subr.mxu0 0.0
  %389 = vmatpush2.msra.mxu0 0.0
  %390 = vmatprep.subr.mxu0 0.0
  %391 = vmatpush2.msra.mxu0 0.0
  %392 = vmatprep.subr.mxu0 0.0
  %393 = vmatpush2.msra.mxu0 0.0
  %394 = vmatprep.subr.mxu0 0.0
  %395 = vmatpush2.msra.mxu0 0.0
  %396 = vmatprep.subr.mxu0 0.0
  %397 = vmatpush2.msra.mxu0 0.0
  %398 = vmatprep.subr.mxu0 0.0
  %399 = vmatpush2.msra.mxu0 0.0
  %400 = vmatprep.subr.mxu0 0.0
  %401 = vmatpush2.msra.mxu0 0.0
  %402 = vmatprep.subr.mxu0 0.0
  %403 = vmatpush2.msra.mxu0 0.0
  %404 = vmatprep.mubr.f32.mxu0 0.0
  %405 = vmatmul.mubr.f32.gmra.mxu0 %v298
  %v406 = vpop.f32.mrf.mxu0
  %v407 = vadd.f32 0.0, %v406
  %v408 = vpop.f32.mrf.mxu0
  %409 = vmatprep.mubr.f32.mxu0 0.0
  %410 = vmatmul.mubr.f32.gmra.mxu0 %v301
  %v411 = vpop.f32.mrf.mxu0
  %v412 = vadd.f32 0.0, %v411
  %v413 = vpop.f32.mrf.mxu0
  %414 = vmatprep.mubr.f32.mxu0 0.0
  %415 = vmatmul.mubr.f32.gmra.mxu0 %v304
  %v416 = vpop.f32.mrf.mxu0
  %v417 = vadd.f32 0.0, %v416
  %v418 = vpop.f32.mrf.mxu0
  %419 = vmatprep.mubr.f32.mxu0 0.0
  %420 = vmatmul.mubr.f32.gmra.mxu0 %v307
  %v421 = vpop.f32.mrf.mxu0
  %v422 = vadd.f32 0.0, %v421
  %v423 = vpop.f32.mrf.mxu0
  %424 = vmatprep.mubr.f32.mxu0 0.0
  %425 = vmatmul.mubr.f32.gmra.mxu0 %v310
  %v426 = vpop.f32.mrf.mxu0
  %v427 = vadd.f32 0.0, %v426
  %v428 = vpop.f32.mrf.mxu0
  %429 = vmatprep.mubr.f32.mxu0 0.0
  %430 = vmatmul.mubr.f32.gmra.mxu0 %v313
  %v431 = vpop.f32.mrf.mxu0
  %v432 = vadd.f32 0.0, %v431
  %v433 = vpop.f32.mrf.mxu0
  %434 = vmatprep.mubr.f32.mxu0 0.0
  %435 = vmatmul.mubr.f32.gmra.mxu0 %v316
  %v436 = vpop.f32.mrf.mxu0
  %v437 = vadd.f32 0.0, %v436
  %v438 = vpop.f32.mrf.mxu0
  %439 = vmatprep.mubr.f32.mxu0 0.0
  %440 = vmatmul.mubr.f32.gmra.mxu0 %v319
  %v441 = vpop.f32.mrf.mxu0
  %v442 = vadd.f32 0.0, %v441
  %v443 = vpop.f32.mrf.mxu0
  %444 = vmatprep.mubr.f32.mxu0 0.0
  %445 = vmatmul.mubr.f32.gmra.mxu0 %v322
  %v446 = vpop.f32.mrf.mxu0
  %v447 = vadd.f32 0.0, %v446
  %v448 = vpop.f32.mrf.mxu0
  %449 = vmatprep.mubr.f32.mxu0 0.0
  %450 = vmatmul.mubr.f32.gmra.mxu0 %v325
  %v451 = vpop.f32.mrf.mxu0
  %v452 = vadd.f32 0.0, %v451
  %v453 = vpop.f32.mrf.mxu0
  %454 = vmatprep.mubr.f32.mxu0 0.0
  %455 = vmatmul.mubr.f32.gmra.mxu0 %v328
  %v456 = vpop.f32.mrf.mxu0
  %v457 = vadd.f32 0.0, %v456
  %v458 = vpop.f32.mrf.mxu0
  %459 = vmatprep.mubr.f32.mxu0 0.0
  %460 = vmatmul.mubr.f32.gmra.mxu0 %v331
  %v461 = vpop.f32.mrf.mxu0
  %v462 = vadd.f32 0.0, %v461
  %v463 = vpop.f32.mrf.mxu0
  %464 = vmatprep.mubr.f32.mxu0 0.0
  %465 = vmatmul.mubr.f32.gmra.mxu0 %v334
  %v466 = vpop.f32.mrf.mxu0
  %v467 = vadd.f32 0.0, %v466
  %v468 = vpop.f32.mrf.mxu0
  %469 = vdwg.mxu0
  %vm483 = vcmask 1046528
  %v484 = vrot.slane %v407, 1
  %v485 = vrot.slane %v412, 1
  %v486 = vsel %vm483, %v484, %v485
  %v487 = vrot.slane %v417, 1
  %v488 = vsel %vm483, %v485, %v487
  %v489 = vrot.slane %v422, 1
  %v490 = vsel %vm483, %v487, %v489
  %v491 = vrot.slane %v427, 1
  %v492 = vsel %vm483, %v489, %v491
  %v493 = vrot.slane %v432, 1
  %v494 = vsel %vm483, %v491, %v493
  %v495 = vrot.slane %v437, 1
  %v496 = vsel %vm483, %v493, %v495
  %v497 = vrot.slane %v442, 1
  %v498 = vsel %vm483, %v495, %v497
  %v499 = vrot.slane %v447, 1
  %v500 = vsel %vm483, %v497, %v499
  %v501 = vrot.slane %v452, 1
  %v502 = vsel %vm483, %v499, %v501
  %v503 = vrot.slane %v457, 1
  %v504 = vsel %vm483, %v501, %v503
  %v505 = vrot.slane %v462, 1
  %v506 = vsel %vm483, %v503, %v505
  %v507 = vrot.slane %v467, 1
  %v508 = vsel %vm483, %v505, %v507
  %509 = vrot.lane.b32.xlu0 %v486, 112
  %v510 = vpop.permute.xlu0 %509
  %511 = vrot.lane.b32.xlu0 %v488, 112
  %v512 = vpop.permute.xlu0 %511
  %513 = vrot.lane.b32.xlu0 %v490, 112
  %v514 = vpop.permute.xlu0 %513
  %515 = vrot.lane.b32.xlu0 %v492, 112
  %v516 = vpop.permute.xlu0 %515
  %517 = vrot.lane.b32.xlu0 %v494, 112
  %v518 = vpop.permute.xlu0 %517
  %519 = vrot.lane.b32.xlu0 %v496, 112
  %v520 = vpop.permute.xlu0 %519
  %521 = vrot.lane.b32.xlu0 %v498, 112
  %v522 = vpop.permute.xlu0 %521
  %523 = vrot.lane.b32.xlu0 %v500, 112
  %v524 = vpop.permute.xlu0 %523
  %525 = vrot.lane.b32.xlu0 %v502, 112
  %v526 = vpop.permute.xlu0 %525
  %527 = vrot.lane.b32.xlu0 %v504, 112
  %v528 = vpop.permute.xlu0 %527
  %529 = vrot.lane.b32.xlu0 %v506, 112
  %v530 = vpop.permute.xlu0 %529
  %531 = vrot.lane.b32.xlu0 %v508, 112
  %v532 = vpop.permute.xlu0 %531
  %v545 = vadd.f32 %v407, %v510
  %v546 = vadd.f32 %v412, %v512
  %v547 = vadd.f32 %v417, %v514
  %v548 = vadd.f32 %v422, %v516
  %v549 = vadd.f32 %v427, %v518
  %v550 = vadd.f32 %v432, %v520
  %v551 = vadd.f32 %v437, %v522
  %v552 = vadd.f32 %v442, %v524
  %v553 = vadd.f32 %v447, %v526
  %v554 = vadd.f32 %v452, %v528
  %v555 = vadd.f32 %v457, %v530
  %v556 = vadd.f32 %v462, %v532
  %vm557 = vcmask 1040384
  %v558 = vrot.slane %v407, 7
  %v559 = vrot.slane %v412, 7
  %v560 = vsel %vm557, %v558, %v559
  %v561 = vrot.slane %v417, 7
  %v562 = vsel %vm557, %v559, %v561
  %v563 = vrot.slane %v422, 7
  %v564 = vsel %vm557, %v561, %v563
  %v565 = vrot.slane %v427, 7
  %v566 = vsel %vm557, %v563, %v565
  %v567 = vrot.slane %v432, 7
  %v568 = vsel %vm557, %v565, %v567
  %v569 = vrot.slane %v437, 7
  %v570 = vsel %vm557, %v567, %v569
  %v571 = vrot.slane %v442, 7
  %v572 = vsel %vm557, %v569, %v571
  %v573 = vrot.slane %v447, 7
  %v574 = vsel %vm557, %v571, %v573
  %v575 = vrot.slane %v452, 7
  %v576 = vsel %vm557, %v573, %v575
  %v577 = vrot.slane %v457, 7
  %v578 = vsel %vm557, %v575, %v577
  %v579 = vrot.slane %v462, 7
  %v580 = vsel %vm557, %v577, %v579
  %v581 = vrot.slane %v467, 7
  %v582 = vsel %vm557, %v579, %v581
  %583 = vrot.lane.b32.xlu0 %v560, 96
  %v584 = vpop.permute.xlu0 %583
  %585 = vrot.lane.b32.xlu0 %v562, 96
  %v586 = vpop.permute.xlu0 %585
  %587 = vrot.lane.b32.xlu0 %v564, 96
  %v588 = vpop.permute.xlu0 %587
  %589 = vrot.lane.b32.xlu0 %v566, 96
  %v590 = vpop.permute.xlu0 %589
  %591 = vrot.lane.b32.xlu0 %v568, 96
  %v592 = vpop.permute.xlu0 %591
  %593 = vrot.lane.b32.xlu0 %v570, 96
  %v594 = vpop.permute.xlu0 %593
  %595 = vrot.lane.b32.xlu0 %v572, 96
  %v596 = vpop.permute.xlu0 %595
  %597 = vrot.lane.b32.xlu0 %v574, 96
  %v598 = vpop.permute.xlu0 %597
  %599 = vrot.lane.b32.xlu0 %v576, 96
  %v600 = vpop.permute.xlu0 %599
  %601 = vrot.lane.b32.xlu0 %v578, 96
  %v602 = vpop.permute.xlu0 %601
  %603 = vrot.lane.b32.xlu0 %v580, 96
  %v604 = vpop.permute.xlu0 %603
  %605 = vrot.lane.b32.xlu0 %v582, 96
  %v606 = vpop.permute.xlu0 %605
  %v619 = vadd.f32 %v545, %v584
  %v620 = vadd.f32 %v546, %v586
  %v621 = vadd.f32 %v547, %v588
  %v622 = vadd.f32 %v548, %v590
  %v623 = vadd.f32 %v549, %v592
  %v624 = vadd.f32 %v550, %v594
  %v625 = vadd.f32 %v551, %v596
  %v626 = vadd.f32 %v552, %v598
  %v627 = vadd.f32 %v553, %v600
  %v628 = vadd.f32 %v554, %v602
  %v629 = vadd.f32 %v555, %v604
  %v630 = vadd.f32 %v556, %v606
  %631 = vrot.lane.b32.xlu0 %v412, 80
  %v632 = vpop.permute.xlu0 %631
  %633 = vrot.lane.b32.xlu0 %v417, 80
  %v634 = vpop.permute.xlu0 %633
  %635 = vrot.lane.b32.xlu0 %v422, 80
  %v636 = vpop.permute.xlu0 %635
  %637 = vrot.lane.b32.xlu0 %v427, 80
  %v638 = vpop.permute.xlu0 %637
  %639 = vrot.lane.b32.xlu0 %v432, 80
  %v640 = vpop.permute.xlu0 %639
  %641 = vrot.lane.b32.xlu0 %v437, 80
  %v642 = vpop.permute.xlu0 %641
  %643 = vrot.lane.b32.xlu0 %v442, 80
  %v644 = vpop.permute.xlu0 %643
  %645 = vrot.lane.b32.xlu0 %v447, 80
  %v646 = vpop.permute.xlu0 %645
  %647 = vrot.lane.b32.xlu0 %v452, 80
  %v648 = vpop.permute.xlu0 %647
  %649 = vrot.lane.b32.xlu0 %v457, 80
  %v650 = vpop.permute.xlu0 %649
  %651 = vrot.lane.b32.xlu0 %v462, 80
  %v652 = vpop.permute.xlu0 %651
  %653 = vrot.lane.b32.xlu0 %v467, 80
  %v654 = vpop.permute.xlu0 %653
  %v667 = vadd.f32 %v619, %v632
  %v668 = vadd.f32 %v620, %v634
  %v669 = vadd.f32 %v621, %v636
  %v670 = vadd.f32 %v622, %v638
  %v671 = vadd.f32 %v623, %v640
  %v672 = vadd.f32 %v624, %v642
  %v673 = vadd.f32 %v625, %v644
  %v674 = vadd.f32 %v626, %v646
  %v675 = vadd.f32 %v627, %v648
  %v676 = vadd.f32 %v628, %v650
  %v677 = vadd.f32 %v629, %v652
  %v678 = vadd.f32 %v630, %v654
  %v679 = vmax.f32 %v667, 0.0
  %v680 = vmax.f32 %v668, 0.0
  %v681 = vmax.f32 %v669, 0.0
  %v682 = vmax.f32 %v670, 0.0
  %v683 = vmax.f32 %v671, 0.0
  %v684 = vmax.f32 %v672, 0.0
  %v685 = vmax.f32 %v673, 0.0
  %v686 = vmax.f32 %v674, 0.0
  %v687 = vmax.f32 %v675, 0.0
  %v688 = vmax.f32 %v676, 0.0
  %v689 = vmax.f32 %v677, 0.0
  %v690 = vmax.f32 %v678, 0.0
  %v703 = vrot.slane %v679, 1
  %v704 = vrot.slane %v680, 1
  %v705 = vsel %vm483, %v703, %v704
  %v706 = vrot.slane %v681, 1
  %v707 = vsel %vm483, %v704, %v706
  %v708 = vrot.slane %v682, 1
  %v709 = vsel %vm483, %v706, %v708
  %v710 = vrot.slane %v683, 1
  %v711 = vsel %vm483, %v708, %v710
  %v712 = vrot.slane %v684, 1
  %v713 = vsel %vm483, %v710, %v712
  %v714 = vrot.slane %v685, 1
  %v715 = vsel %vm483, %v712, %v714
  %v716 = vrot.slane %v686, 1
  %v717 = vsel %vm483, %v714, %v716
  %v718 = vrot.slane %v687, 1
  %v719 = vsel %vm483, %v716, %v718
  %v720 = vrot.slane %v688, 1
  %v721 = vsel %vm483, %v718, %v720
  %v722 = vrot.slane %v689, 1
  %v723 = vsel %vm483, %v720, %v722
  %v724 = vrot.slane %v690, 1
  %v725 = vsel %vm483, %v722, %v724
  %v738 = vmax.f32 %v679, %v705
  %v739 = vmax.f32 %v680, %v707
  %v740 = vmax.f32 %v681, %v709
  %v741 = vmax.f32 %v682, %v711
  %v742 = vmax.f32 %v683, %v713
  %v743 = vmax.f32 %v684, %v715
  %v744 = vmax.f32 %v685, %v717
  %v745 = vmax.f32 %v686, %v719
  %v746 = vmax.f32 %v687, %v721
  %v747 = vmax.f32 %v688, %v723
  %v748 = vmax.f32 %v689, %v725
  %v749 = vmax.f32 %v690, %v724
  %v762 = vrot.slane %v738, 7
  %v763 = vrot.slane %v739, 7
  %v764 = vsel %vm557, %v762, %v763
  %v765 = vrot.slane %v740, 7
  %v766 = vsel %vm557, %v763, %v765
  %v767 = vrot.slane %v741, 7
  %v768 = vsel %vm557, %v765, %v767
  %v769 = vrot.slane %v742, 7
  %v770 = vsel %vm557, %v767, %v769
  %v771 = vrot.slane %v743, 7
  %v772 = vsel %vm557, %v769, %v771
  %v773 = vrot.slane %v744, 7
  %v774 = vsel %vm557, %v771, %v773
  %v775 = vrot.slane %v745, 7
  %v776 = vsel %vm557, %v773, %v775
  %v777 = vrot.slane %v746, 7
  %v778 = vsel %vm557, %v775, %v777
  %v779 = vrot.slane %v747, 7
  %v780 = vsel %vm557, %v777, %v779
  %v781 = vrot.slane %v748, 7
  %v782 = vsel %vm557, %v779, %v781
  %v783 = vrot.slane %v749, 7
  %v784 = vsel %vm557, %v781, %v783
  %v796 = vmax.f32 %v738, %v764
  %v797 = vmax.f32 %v739, %v766
  %v798 = vmax.f32 %v740, %v768
  %v799 = vmax.f32 %v741, %v770
  %v800 = vmax.f32 %v742, %v772
  %v801 = vmax.f32 %v743, %v774
  %v802 = vmax.f32 %v744, %v776
  %v803 = vmax.f32 %v745, %v778
  %v804 = vmax.f32 %v746, %v780
  %v805 = vmax.f32 %v747, %v782
  %v806 = vmax.f32 %v748, %v784
  %vm807 = vcmask 130048
  %v809 = vsel %vm807, %v796, 0
  %v812 = vsel %vm807, %v797, 0
  %v815 = vsel %vm807, %v798, 0
  %v818 = vsel %vm807, %v799, 0
  %v821 = vsel %vm807, %v800, 0
  %v824 = vsel %vm807, %v801, 0
  %v827 = vsel %vm807, %v802, 0
  %v830 = vsel %vm807, %v803, 0
  %v833 = vsel %vm807, %v804, 0
  %v836 = vsel %vm807, %v805, 0
  %v839 = vsel %vm807, %v806, 0
  %841 = vmatprep.subr.mxu0 0.0
  %842 = vmatpush1.msra.mxu0 0.0
  %843 = vmatprep.subr.mxu0 0.0
  %844 = vmatpush1.msra.mxu0 0.0
  %845 = vmatprep.subr.mxu0 0.0
  %846 = vmatpush1.msra.mxu0 0.0
  %847 = vmatprep.subr.mxu0 0.0
  %848 = vmatpush1.msra.mxu0 0.0
  %849 = vmatprep.subr.mxu0 0.0
  %850 = vmatpush1.msra.mxu0 0.0
  %851 = vmatprep.subr.mxu0 0.0
  %852 = vmatpush1.msra.mxu0 0.0
  %853 = vmatprep.subr.mxu0 0.0
  %854 = vmatpush1.msra.mxu0 0.0
  %855 = vmatprep.subr.mxu0 0.0
  %856 = vmatpush1.msra.mxu0 0.0
  %857 = vmatprep.subr.mxu0 0.0
  %858 = vmatpush1.msra.mxu0 0.0
  %859 = vmatprep.subr.mxu0 0.0
  %860 = vmatpush1.msra.mxu0 0.0
  %861 = vmatprep.subr.mxu0 0.0
  %862 = vmatpush1.msra.mxu0 0.0
  %863 = vmatprep.subr.mxu0 0.0
  %864 = vmatpush1.msra.mxu0 0.0
  %865 = vmatprep.subr.mxu0 0.0
  %866 = vmatpush1.msra.mxu0 0.0
  %867 = vmatprep.subr.mxu0 0.0
  %868 = vmatpush1.msra.mxu0 0.0
  %869 = vmatprep.subr.mxu0 0.0
  %870 = vmatpush1.msra.mxu0 %v18
  %871 = vmatprep.subr.mxu0 0.0
  %872 = vmatpush1.msra.mxu0 %v17
  %873 = vmatprep.subr.mxu0 0.0
  %874 = vmatpush2.msra.mxu0 0.0
  %875 = vmatprep.subr.mxu0 0.0
  %876 = vmatpush2.msra.mxu0 0.0
  %877 = vmatprep.subr.mxu0 0.0
  %878 = vmatpush2.msra.mxu0 0.0
  %879 = vmatprep.subr.mxu0 0.0
  %880 = vmatpush2.msra.mxu0 0.0
  %881 = vmatprep.subr.mxu0 0.0
  %882 = vmatpush2.msra.mxu0 0.0
  %883 = vmatprep.subr.mxu0 0.0
  %884 = vmatpush2.msra.mxu0 0.0
  %885 = vmatprep.subr.mxu0 0.0
  %886 = vmatpush2.msra.mxu0 0.0
  %887 = vmatprep.subr.mxu0 0.0
  %888 = vmatpush2.msra.mxu0 0.0
  %889 = vmatprep.subr.mxu0 0.0
  %890 = vmatpush2.msra.mxu0 0.0
  %891 = vmatprep.subr.mxu0 0.0
  %892 = vmatpush2.msra.mxu0 0.0
  %893 = vmatprep.subr.mxu0 0.0
  %894 = vmatpush2.msra.mxu0 0.0
  %895 = vmatprep.subr.mxu0 0.0
  %896 = vmatpush2.msra.mxu0 0.0
  %897 = vmatprep.subr.mxu0 0.0
  %898 = vmatpush2.msra.mxu0 0.0
  %899 = vmatprep.subr.mxu0 0.0
  %900 = vmatpush2.msra.mxu0 0.0
  %901 = vmatprep.subr.mxu0 0.0
  %902 = vmatpush2.msra.mxu0 0.0
  %903 = vmatprep.subr.mxu0 0.0
  %904 = vmatpush2.msra.mxu0 0.0
  %905 = vmatprep.mubr.f32.mxu0 0.0
  %906 = vmatmul.mubr.f32.gmra.mxu0 %v809
  %v907 = vpop.f32.mrf.mxu0
  %v908 = vadd.f32 0.0, %v907
  %v909 = vpop.f32.mrf.mxu0
  %910 = vmatprep.mubr.f32.mxu0 0.0
  %911 = vmatmul.mubr.f32.gmra.mxu0 %v812
  %v912 = vpop.f32.mrf.mxu0
  %v913 = vadd.f32 0.0, %v912
  %v914 = vpop.f32.mrf.mxu0
  %915 = vmatprep.mubr.f32.mxu0 0.0
  %916 = vmatmul.mubr.f32.gmra.mxu0 %v815
  %v917 = vpop.f32.mrf.mxu0
  %v918 = vadd.f32 0.0, %v917
  %v919 = vpop.f32.mrf.mxu0
  %920 = vmatprep.mubr.f32.mxu0 0.0
  %921 = vmatmul.mubr.f32.gmra.mxu0 %v818
  %v922 = vpop.f32.mrf.mxu0
  %v923 = vadd.f32 0.0, %v922
  %v924 = vpop.f32.mrf.mxu0
  %925 = vmatprep.mubr.f32.mxu0 0.0
  %926 = vmatmul.mubr.f32.gmra.mxu0 %v821
  %v927 = vpop.f32.mrf.mxu0
  %v928 = vadd.f32 0.0, %v927
  %v929 = vpop.f32.mrf.mxu0
  %930 = vmatprep.mubr.f32.mxu0 0.0
  %931 = vmatmul.mubr.f32.gmra.mxu0 %v824
  %v932 = vpop.f32.mrf.mxu0
  %v933 = vadd.f32 0.0, %v932
  %v934 = vpop.f32.mrf.mxu0
  %935 = vmatprep.mubr.f32.mxu0 0.0
  %936 = vmatmul.mubr.f32.gmra.mxu0 %v827
  %v937 = vpop.f32.mrf.mxu0
  %v938 = vadd.f32 0.0, %v937
  %v939 = vpop.f32.mrf.mxu0
  %940 = vmatprep.mubr.f32.mxu0 0.0
  %941 = vmatmul.mubr.f32.gmra.mxu0 %v830
  %v942 = vpop.f32.mrf.mxu0
  %v943 = vadd.f32 0.0, %v942
  %v944 = vpop.f32.mrf.mxu0
  %945 = vmatprep.mubr.f32.mxu0 0.0
  %946 = vmatmul.mubr.f32.gmra.mxu0 %v833
  %v947 = vpop.f32.mrf.mxu0
  %v948 = vadd.f32 0.0, %v947
  %v949 = vpop.f32.mrf.mxu0
  %950 = vmatprep.mubr.f32.mxu0 0.0
  %951 = vmatmul.mubr.f32.gmra.mxu0 %v836
  %v952 = vpop.f32.mrf.mxu0
  %v953 = vadd.f32 0.0, %v952
  %v954 = vpop.f32.mrf.mxu0
  %955 = vmatprep.mubr.f32.mxu0 0.0
  %956 = vmatmul.mubr.f32.gmra.mxu0 %v839
  %v957 = vpop.f32.mrf.mxu0
  %v958 = vadd.f32 0.0, %v957
  %v959 = vpop.f32.mrf.mxu0
  %960 = vdwg.mxu0
  %v961 = vlaneseq
  %v962 = vshrl.u32 %v961, 7
  %v963 = vsub.s32 0, %v962
  %v964 = vrot.slane %v41, %v963
  %v965 = vadd.f32 %v964, %v908
  %v966 = vadd.f32 %v964, %v913
  %v967 = vadd.f32 %v964, %v918
  %v968 = vadd.f32 %v964, %v923
  %v969 = vadd.f32 %v964, %v928
  %v970 = vadd.f32 %v964, %v933
  %v971 = vadd.f32 %v964, %v938
  %v972 = vadd.f32 %v964, %v943
  %v973 = vadd.f32 %v964, %v948
  %vm984 = vcmask 1045504
  %v985 = vrot.slane %v908, 2
  %v986 = vrot.slane %v913, 2
  %v987 = vsel %vm984, %v985, %v986
  %v988 = vrot.slane %v918, 2
  %v989 = vsel %vm984, %v986, %v988
  %v990 = vrot.slane %v923, 2
  %v991 = vsel %vm984, %v988, %v990
  %v992 = vrot.slane %v928, 2
  %v993 = vsel %vm984, %v990, %v992
  %v994 = vrot.slane %v933, 2
  %v995 = vsel %vm984, %v992, %v994
  %v996 = vrot.slane %v938, 2
  %v997 = vsel %vm984, %v994, %v996
  %v998 = vrot.slane %v943, 2
  %v999 = vsel %vm984, %v996, %v998
  %v1000 = vrot.slane %v948, 2
  %v1001 = vsel %vm984, %v998, %v1000
  %v1002 = vrot.slane %v953, 2
  %v1003 = vsel %vm984, %v1000, %v1002
  %1004 = vrot.lane.b32.xlu0 %v987, 112
  %v1005 = vpop.permute.xlu0 %1004
  %1006 = vrot.lane.b32.xlu0 %v989, 112
  %v1007 = vpop.permute.xlu0 %1006
  %1008 = vrot.lane.b32.xlu0 %v991, 112
  %v1009 = vpop.permute.xlu0 %1008
  %1010 = vrot.lane.b32.xlu0 %v993, 112
  %v1011 = vpop.permute.xlu0 %1010
  %1012 = vrot.lane.b32.xlu0 %v995, 112
  %v1013 = vpop.permute.xlu0 %1012
  %1014 = vrot.lane.b32.xlu0 %v997, 112
  %v1015 = vpop.permute.xlu0 %1014
  %1016 = vrot.lane.b32.xlu0 %v999, 112
  %v1017 = vpop.permute.xlu0 %1016
  %1018 = vrot.lane.b32.xlu0 %v1001, 112
  %v1019 = vpop.permute.xlu0 %1018
  %1020 = vrot.lane.b32.xlu0 %v1003, 112
  %v1021 = vpop.permute.xlu0 %1020
  %v1031 = vadd.f32 %v965, %v1005
  %v1032 = vadd.f32 %v966, %v1007
  %v1033 = vadd.f32 %v967, %v1009
  %v1034 = vadd.f32 %v968, %v1011
  %v1035 = vadd.f32 %v969, %v1013
  %v1036 = vadd.f32 %v970, %v1015
  %v1037 = vadd.f32 %v971, %v1017
  %v1038 = vadd.f32 %v972, %v1019
  %v1039 = vadd.f32 %v973, %v1021
  %vm1041 = vcmask 1041408
  %v1042 = vrot.slane %v913, 6
  %v1043 = vrot.slane %v918, 6
  %v1044 = vsel %vm1041, %v1042, %v1043
  %v1045 = vrot.slane %v923, 6
  %v1046 = vsel %vm1041, %v1043, %v1045
  %v1047 = vrot.slane %v928, 6
  %v1048 = vsel %vm1041, %v1045, %v1047
  %v1049 = vrot.slane %v933, 6
  %v1050 = vsel %vm1041, %v1047, %v1049
  %v1051 = vrot.slane %v938, 6
  %v1052 = vsel %vm1041, %v1049, %v1051
  %v1053 = vrot.slane %v943, 6
  %v1054 = vsel %vm1041, %v1051, %v1053
  %v1055 = vrot.slane %v948, 6
  %v1056 = vsel %vm1041, %v1053, %v1055
  %v1057 = vrot.slane %v953, 6
  %v1058 = vsel %vm1041, %v1055, %v1057
  %v1059 = vrot.slane %v958, 6
  %v1060 = vsel %vm1041, %v1057, %v1059
  %1061 = vrot.lane.b32.xlu0 %v1044, 96
  %v1062 = vpop.permute.xlu0 %1061
  %1063 = vrot.lane.b32.xlu0 %v1046, 96
  %v1064 = vpop.permute.xlu0 %1063
  %1065 = vrot.lane.b32.xlu0 %v1048, 96
  %v1066 = vpop.permute.xlu0 %1065
  %1067 = vrot.lane.b32.xlu0 %v1050, 96
  %v1068 = vpop.permute.xlu0 %1067
  %1069 = vrot.lane.b32.xlu0 %v1052, 96
  %v1070 = vpop.permute.xlu0 %1069
  %1071 = vrot.lane.b32.xlu0 %v1054, 96
  %v1072 = vpop.permute.xlu0 %1071
  %1073 = vrot.lane.b32.xlu0 %v1056, 96
  %v1074 = vpop.permute.xlu0 %1073
  %1075 = vrot.lane.b32.xlu0 %v1058, 96
  %v1076 = vpop.permute.xlu0 %1075
  %1077 = vrot.lane.b32.xlu0 %v1060, 96
  %v1078 = vpop.permute.xlu0 %1077
  %v1088 = vadd.f32 %v1031, %v1062
  %v1089 = vadd.f32 %v1032, %v1064
  %v1090 = vadd.f32 %v1033, %v1066
  %v1091 = vadd.f32 %v1034, %v1068
  %v1092 = vadd.f32 %v1035, %v1070
  %v1093 = vadd.f32 %v1036, %v1072
  %v1094 = vadd.f32 %v1037, %v1074
  %v1095 = vadd.f32 %v1038, %v1076
  %v1096 = vadd.f32 %v1039, %v1078
  %1097 = vrot.lane.b32.xlu0 %v918, 80
  %v1098 = vpop.permute.xlu0 %1097
  %1099 = vrot.lane.b32.xlu0 %v923, 80
  %v1100 = vpop.permute.xlu0 %1099
  %1101 = vrot.lane.b32.xlu0 %v928, 80
  %v1102 = vpop.permute.xlu0 %1101
  %1103 = vrot.lane.b32.xlu0 %v933, 80
  %v1104 = vpop.permute.xlu0 %1103
  %1105 = vrot.lane.b32.xlu0 %v938, 80
  %v1106 = vpop.permute.xlu0 %1105
  %1107 = vrot.lane.b32.xlu0 %v943, 80
  %v1108 = vpop.permute.xlu0 %1107
  %1109 = vrot.lane.b32.xlu0 %v948, 80
  %v1110 = vpop.permute.xlu0 %1109
  %1111 = vrot.lane.b32.xlu0 %v953, 80
  %v1112 = vpop.permute.xlu0 %1111
  %1113 = vrot.lane.b32.xlu0 %v958, 80
  %v1114 = vpop.permute.xlu0 %1113
  %v1124 = vadd.f32 %v1088, %v1098
  %v1125 = vadd.f32 %v1089, %v1100
  %v1126 = vadd.f32 %v1090, %v1102
  %v1127 = vadd.f32 %v1091, %v1104
  %v1128 = vadd.f32 %v1092, %v1106
  %v1129 = vadd.f32 %v1093, %v1108
  %v1130 = vadd.f32 %v1094, %v1110
  %v1131 = vadd.f32 %v1095, %v1112
  %v1132 = vadd.f32 %v1096, %v1114
  %v1133 = vmax.f32 %v1124, 0.0
  %v1134 = vmax.f32 %v1125, 0.0
  %v1135 = vmax.f32 %v1126, 0.0
  %v1136 = vmax.f32 %v1127, 0.0
  %v1137 = vmax.f32 %v1128, 0.0
  %v1138 = vmax.f32 %v1129, 0.0
  %v1139 = vmax.f32 %v1130, 0.0
  %v1140 = vmax.f32 %v1131, 0.0
  %v1141 = vmax.f32 %v1132, 0.0
  %v1143 = vsel %vm807, %v1133, 0
  %v1146 = vsel %vm807, %v1134, 0
  %v1149 = vsel %vm807, %v1135, 0
  %v1152 = vsel %vm807, %v1136, 0
  %v1155 = vsel %vm807, %v1137, 0
  %v1158 = vsel %vm807, %v1138, 0
  %v1161 = vsel %vm807, %v1139, 0
  %v1164 = vsel %vm807, %v1140, 0
  %v1167 = vsel %vm807, %v1141, 0
  %1169 = vmatprep.subr.mxu0 0.0
  %1170 = vmatpush1.msra.mxu0 0.0
  %1171 = vmatprep.subr.mxu0 0.0
  %1172 = vmatpush1.msra.mxu0 0.0
  %1173 = vmatprep.subr.mxu0 0.0
  %1174 = vmatpush1.msra.mxu0 0.0
  %1175 = vmatprep.subr.mxu0 0.0
  %1176 = vmatpush1.msra.mxu0 0.0
  %1177 = vmatprep.subr.mxu0 0.0
  %1178 = vmatpush1.msra.mxu0 0.0
  %1179 = vmatprep.subr.mxu0 0.0
  %1180 = vmatpush1.msra.mxu0 0.0
  %1181 = vmatprep.subr.mxu0 0.0
  %1182 = vmatpush1.msra.mxu0 0.0
  %1183 = vmatprep.subr.mxu0 0.0
  %1184 = vmatpush1.msra.mxu0 0.0
  %1185 = vmatprep.subr.mxu0 0.0
  %1186 = vmatpush1.msra.mxu0 0.0
  %1187 = vmatprep.subr.mxu0 0.0
  %1188 = vmatpush1.msra.mxu0 0.0
  %1189 = vmatprep.subr.mxu0 0.0
  %1190 = vmatpush1.msra.mxu0 0.0
  %1191 = vmatprep.subr.mxu0 0.0
  %1192 = vmatpush1.msra.mxu0 0.0
  %1193 = vmatprep.subr.mxu0 0.0
  %1194 = vmatpush1.msra.mxu0 0.0
  %1195 = vmatprep.subr.mxu0 0.0
  %1196 = vmatpush1.msra.mxu0 0.0
  %1197 = vmatprep.subr.mxu0 0.0
  %1198 = vmatpush1.msra.mxu0 %v20
  %1199 = vmatprep.subr.mxu0 0.0
  %1200 = vmatpush1.msra.mxu0 %v19
  %1201 = vmatprep.subr.mxu0 0.0
  %1202 = vmatpush2.msra.mxu0 0.0
  %1203 = vmatprep.subr.mxu0 0.0
  %1204 = vmatpush2.msra.mxu0 0.0
  %1205 = vmatprep.subr.mxu0 0.0
  %1206 = vmatpush2.msra.mxu0 0.0
  %1207 = vmatprep.subr.mxu0 0.0
  %1208 = vmatpush2.msra.mxu0 0.0
  %1209 = vmatprep.subr.mxu0 0.0
  %1210 = vmatpush2.msra.mxu0 0.0
  %1211 = vmatprep.subr.mxu0 0.0
  %1212 = vmatpush2.msra.mxu0 0.0
  %1213 = vmatprep.subr.mxu0 0.0
  %1214 = vmatpush2.msra.mxu0 0.0
  %1215 = vmatprep.subr.mxu0 0.0
  %1216 = vmatpush2.msra.mxu0 0.0
  %1217 = vmatprep.subr.mxu0 0.0
  %1218 = vmatpush2.msra.mxu0 0.0
  %1219 = vmatprep.subr.mxu0 0.0
  %1220 = vmatpush2.msra.mxu0 0.0
  %1221 = vmatprep.subr.mxu0 0.0
  %1222 = vmatpush2.msra.mxu0 0.0
  %1223 = vmatprep.subr.mxu0 0.0
  %1224 = vmatpush2.msra.mxu0 0.0
  %1225 = vmatprep.subr.mxu0 0.0
  %1226 = vmatpush2.msra.mxu0 0.0
  %1227 = vmatprep.subr.mxu0 0.0
  %1228 = vmatpush2.msra.mxu0 0.0
  %1229 = vmatprep.subr.mxu0 0.0
  %1230 = vmatpush2.msra.mxu0 0.0
  %1231 = vmatprep.subr.mxu0 0.0
  %1232 = vmatpush2.msra.mxu0 0.0
  %1233 = vmatprep.mubr.f32.mxu0 0.0
  %1234 = vmatmul.mubr.f32.gmra.mxu0 %v1143
  %v1235 = vpop.f32.mrf.mxu0
  %v1236 = vadd.f32 0.0, %v1235
  %v1237 = vpop.f32.mrf.mxu0
  %1238 = vmatprep.mubr.f32.mxu0 0.0
  %1239 = vmatmul.mubr.f32.gmra.mxu0 %v1146
  %v1240 = vpop.f32.mrf.mxu0
  %v1241 = vadd.f32 0.0, %v1240
  %v1242 = vpop.f32.mrf.mxu0
  %1243 = vmatprep.mubr.f32.mxu0 0.0
  %1244 = vmatmul.mubr.f32.gmra.mxu0 %v1149
  %v1245 = vpop.f32.mrf.mxu0
  %v1246 = vadd.f32 0.0, %v1245
  %v1247 = vpop.f32.mrf.mxu0
  %1248 = vmatprep.mubr.f32.mxu0 0.0
  %1249 = vmatmul.mubr.f32.gmra.mxu0 %v1152
  %v1250 = vpop.f32.mrf.mxu0
  %v1251 = vpop.f32.mrf.mxu0
  %1252 = vmatprep.mubr.f32.mxu0 0.0
  %1253 = vmatmul.mubr.f32.gmra.mxu0 %v1155
  %v1254 = vpop.f32.mrf.mxu0
  %v1255 = vpop.f32.mrf.mxu0
  %1256 = vmatprep.mubr.f32.mxu0 0.0
  %1257 = vmatmul.mubr.f32.gmra.mxu0 %v1158
  %v1258 = vpop.f32.mrf.mxu0
  %v1259 = vpop.f32.mrf.mxu0
  %1260 = vmatprep.mubr.f32.mxu0 0.0
  %1261 = vmatmul.mubr.f32.gmra.mxu0 %v1161
  %v1262 = vpop.f32.mrf.mxu0
  %v1263 = vadd.f32 0.0, %v1262
  %v1264 = vpop.f32.mrf.mxu0
  %1265 = vmatprep.mubr.f32.mxu0 0.0
  %1266 = vmatmul.mubr.f32.gmra.mxu0 %v1164
  %v1267 = vpop.f32.mrf.mxu0
  %v1268 = vadd.f32 0.0, %v1267
  %v1269 = vpop.f32.mrf.mxu0
  %1270 = vmatprep.mubr.f32.mxu0 0.0
  %1271 = vmatmul.mubr.f32.gmra.mxu0 %v1167
  %v1272 = vpop.f32.mrf.mxu0
  %v1273 = vadd.f32 0.0, %v1272
  %v1274 = vpop.f32.mrf.mxu0
  %1275 = vdwg.mxu0
  %v1277 = vrot.slane %v1236, 2
  %1278 = vrot.lane.b32.xlu0 %v1277, 96
  %v1279 = vpop.permute.xlu0 %1278
  %v1281 = vadd.f32 %v1236, %v1279
  %v1283 = vrot.slane %v1241, 6
  %1284 = vrot.lane.b32.xlu0 %v1283, 64
  %v1285 = vpop.permute.xlu0 %1284
  %v1287 = vadd.f32 %v1281, %v1285
  %1289 = vrot.lane.b32.xlu0 %v1246, 32
  %v1290 = vpop.permute.xlu0 %1289
  %v1292 = vadd.f32 %v1287, %v1290
  %v1294 = vrot.slane %v1263, 2
  %1295 = vrot.lane.b32.xlu0 %v1294, 96
  %v1296 = vpop.permute.xlu0 %1295
  %v1298 = vadd.f32 %v1263, %v1296
  %v1300 = vrot.slane %v1268, 6
  %1301 = vrot.lane.b32.xlu0 %v1300, 64
  %v1302 = vpop.permute.xlu0 %1301
  %v1304 = vadd.f32 %v1298, %v1302
  %1306 = vrot.lane.b32.xlu0 %v1273, 32
  %v1307 = vpop.permute.xlu0 %1306
  %v1309 = vadd.f32 %v1304, %v1307
  %v1310 = vsel %vm557, %v1292, %v1309
  %v1311 = vlaneseq
  %v1312 = vshrl.u32 %v1311, 7
  %v1313 = vsub.s32 0, %v1312
  %v1314 = vrot.slane %v42, %v1313
  %v1315 = vadd.f32 %v1310, %v1314
  %v1316 = vmax.f32 %v1315, 0.0
  %v1317 = vld [vmem:[%s1] sm:$0x3]
  %1319 = vrot.lane.b32.xlu0 %v1317, 32
  %v1320 = vpop.permute.xlu0 %1319
  %vm1322 = vcmask 261120
  %v1323 = vsel %vm1322, %v1316, %v1320
  %v1324 = vlaneseq
  %v1325 = vshrl.u32 %v1324, 7
  %v1326 = vsub.s32 0, %v1325
  %v1327 = vrot.slane %v43, %v1326
  %vm1328 = vcmask 523264
  %v1330 = vsel %vm1328, %v1323, 0
  %1332 = vmatprep.subr.mxu0 0.0
  %1333 = vmatpush1.msra.mxu0 0.0
  %1334 = vmatprep.subr.mxu0 0.0
  %1335 = vmatpush1.msra.mxu0 0.0
  %1336 = vmatprep.subr.mxu0 0.0
  %1337 = vmatpush1.msra.mxu0 0.0
  %1338 = vmatprep.subr.mxu0 0.0
  %1339 = vmatpush1.msra.mxu0 0.0
  %1340 = vmatprep.subr.mxu0 0.0
  %1341 = vmatpush1.msra.mxu0 0.0
  %1342 = vmatprep.subr.mxu0 0.0
  %1343 = vmatpush1.msra.mxu0 0.0
  %1344 = vmatprep.subr.mxu0 0.0
  %1345 = vmatpush1.msra.mxu0 0.0
  %1346 = vmatprep.subr.mxu0 0.0
  %1347 = vmatpush1.msra.mxu0 0.0
  %1348 = vmatprep.subr.mxu0 0.0
  %1349 = vmatpush1.msra.mxu0 %v28
  %1350 = vmatprep.subr.mxu0 0.0
  %1351 = vmatpush1.msra.mxu0 %v27
  %1352 = vmatprep.subr.mxu0 0.0
  %1353 = vmatpush1.msra.mxu0 %v26
  %1354 = vmatprep.subr.mxu0 0.0
  %1355 = vmatpush1.msra.mxu0 %v25
  %1356 = vmatprep.subr.mxu0 0.0
  %1357 = vmatpush1.msra.mxu0 %v24
  %1358 = vmatprep.subr.mxu0 0.0
  %1359 = vmatpush1.msra.mxu0 %v23
  %1360 = vmatprep.subr.mxu0 0.0
  %1361 = vmatpush1.msra.mxu0 %v22
  %1362 = vmatprep.subr.mxu0 0.0
  %1363 = vmatpush1.msra.mxu0 %v21
  %1364 = vmatprep.subr.mxu0 0.0
  %1365 = vmatpush2.msra.mxu0 0.0
  %1366 = vmatprep.subr.mxu0 0.0
  %1367 = vmatpush2.msra.mxu0 0.0
  %1368 = vmatprep.subr.mxu0 0.0
  %1369 = vmatpush2.msra.mxu0 0.0
  %1370 = vmatprep.subr.mxu0 0.0
  %1371 = vmatpush2.msra.mxu0 0.0
  %1372 = vmatprep.subr.mxu0 0.0
  %1373 = vmatpush2.msra.mxu0 0.0
  %1374 = vmatprep.subr.mxu0 0.0
  %1375 = vmatpush2.msra.mxu0 0.0
  %1376 = vmatprep.subr.mxu0 0.0
  %1377 = vmatpush2.msra.mxu0 0.0
  %1378 = vmatprep.subr.mxu0 0.0
  %1379 = vmatpush2.msra.mxu0 0.0
  %1380 = vmatprep.subr.mxu0 0.0
  %1381 = vmatpush2.msra.mxu0 0.0
  %1382 = vmatprep.subr.mxu0 0.0
  %1383 = vmatpush2.msra.mxu0 0.0
  %1384 = vmatprep.subr.mxu0 0.0
  %1385 = vmatpush2.msra.mxu0 0.0
  %1386 = vmatprep.subr.mxu0 0.0
  %1387 = vmatpush2.msra.mxu0 0.0
  %1388 = vmatprep.subr.mxu0 0.0
  %1389 = vmatpush2.msra.mxu0 0.0
  %1390 = vmatprep.subr.mxu0 0.0
  %1391 = vmatpush2.msra.mxu0 0.0
  %1392 = vmatprep.subr.mxu0 0.0
  %1393 = vmatpush2.msra.mxu0 0.0
  %1394 = vmatprep.subr.mxu0 0.0
  %1395 = vmatpush2.msra.mxu0 0.0
  %1396 = vmatprep.mubr.f32.mxu0 0.0
  %1397 = vmatmul.mubr.f32.gmra.mxu0 %v1330
  %v1398 = vpop.f32.mrf.mxu0
  %v1399 = vadd.f32 %v1327, %v1398
  %v1400 = vpop.f32.mrf.mxu0
  %1401 = vdwg.mxu0
  %v1402 = vxor.u32 %v1399, 2147483648
  %v1403 = vmul.f32 %v1402, 1.442695
  %v1404 = vpow.pop %v1403
  %v1405 = vadd.f32 %v1404, 1.0
  %v1406 = vrcp.pop %v1405
  %v1407 = vmul.f32 1.0, %v1406
  %v1408 = vtanh.pop %v1399
  %v1409 = vmul.f32 %v1407, %v1317
  %1411 = vrot.lane.b32.xlu0 %v1408, 64
  %v1412 = vpop.permute.xlu0 %1411
  %v1414 = vmul.f32 %v1407, %v1412
  %1416 = vrot.lane.b32.xlu0 %v1414, 32
  %v1417 = vpop.permute.xlu0 %1416
  %v1419 = vadd.f32 %v1409, %v1417
  %v1420 = vtanh.pop %v1419
  %1422 = vrot.lane.b32.xlu0 %v1420, 64
  %v1423 = vpop.permute.xlu0 %1422
  %v1425 = vmul.f32 %v1407, %v1423
  %v1426 = vlaneseq
  %v1427 = vshrl.u32 %v1426, 7
  %v1428 = vsub.s32 0, %v1427
  %v1429 = vrot.slane %v44, %v1428
  %1431 = vrot.lane.b32.xlu0 %v1425, 32
  %v1432 = vpop.permute.xlu0 %1431
  %v1433 = vsel %vm1322, %v1432, 0
  %1435 = vmatprep.subr.mxu0 0.0
  %1436 = vmatpush1.msra.mxu0 0.0
  %1437 = vmatprep.subr.mxu0 0.0
  %1438 = vmatpush1.msra.mxu0 0.0
  %1439 = vmatprep.subr.mxu0 0.0
  %1440 = vmatpush1.msra.mxu0 0.0
  %1441 = vmatprep.subr.mxu0 0.0
  %1442 = vmatpush1.msra.mxu0 0.0
  %1443 = vmatprep.subr.mxu0 0.0
  %1444 = vmatpush1.msra.mxu0 0.0
  %1445 = vmatprep.subr.mxu0 0.0
  %1446 = vmatpush1.msra.mxu0 0.0
  %1447 = vmatprep.subr.mxu0 0.0
  %1448 = vmatpush1.msra.mxu0 0.0
  %1449 = vmatprep.subr.mxu0 0.0
  %1450 = vmatpush1.msra.mxu0 0.0
  %1451 = vmatprep.subr.mxu0 0.0
  %1452 = vmatpush1.msra.mxu0 0.0
  %1453 = vmatprep.subr.mxu0 0.0
  %1454 = vmatpush1.msra.mxu0 0.0
  %1455 = vmatprep.subr.mxu0 0.0
  %1456 = vmatpush1.msra.mxu0 0.0
  %1457 = vmatprep.subr.mxu0 0.0
  %1458 = vmatpush1.msra.mxu0 0.0
  %1459 = vmatprep.subr.mxu0 0.0
  %1460 = vmatpush1.msra.mxu0 %v32
  %1461 = vmatprep.subr.mxu0 0.0
  %1462 = vmatpush1.msra.mxu0 %v31
  %1463 = vmatprep.subr.mxu0 0.0
  %1464 = vmatpush1.msra.mxu0 %v30
  %1465 = vmatprep.subr.mxu0 0.0
  %1466 = vmatpush1.msra.mxu0 %v29
  %1467 = vmatprep.subr.mxu0 0.0
  %1468 = vmatpush2.msra.mxu0 0.0
  %1469 = vmatprep.subr.mxu0 0.0
  %1470 = vmatpush2.msra.mxu0 0.0
  %1471 = vmatprep.subr.mxu0 0.0
  %1472 = vmatpush2.msra.mxu0 0.0
  %1473 = vmatprep.subr.mxu0 0.0
  %1474 = vmatpush2.msra.mxu0 0.0
  %1475 = vmatprep.subr.mxu0 0.0
  %1476 = vmatpush2.msra.mxu0 0.0
  %1477 = vmatprep.subr.mxu0 0.0
  %1478 = vmatpush2.msra.mxu0 0.0
  %1479 = vmatprep.subr.mxu0 0.0
  %1480 = vmatpush2.msra.mxu0 0.0
  %1481 = vmatprep.subr.mxu0 0.0
  %1482 = vmatpush2.msra.mxu0 0.0
  %1483 = vmatprep.subr.mxu0 0.0
  %1484 = vmatpush2.msra.mxu0 0.0
  %1485 = vmatprep.subr.mxu0 0.0
  %1486 = vmatpush2.msra.mxu0 0.0
  %1487 = vmatprep.subr.mxu0 0.0
  %1488 = vmatpush2.msra.mxu0 0.0
  %1489 = vmatprep.subr.mxu0 0.0
  %1490 = vmatpush2.msra.mxu0 0.0
  %1491 = vmatprep.subr.mxu0 0.0
  %1492 = vmatpush2.msra.mxu0 0.0
  %1493 = vmatprep.subr.mxu0 0.0
  %1494 = vmatpush2.msra.mxu0 0.0
  %1495 = vmatprep.subr.mxu0 0.0
  %1496 = vmatpush2.msra.mxu0 0.0
  %1497 = vmatprep.subr.mxu0 0.0
  %1498 = vmatpush2.msra.mxu0 0.0
  %1499 = vmatprep.mubr.f32.mxu0 0.0
  %1500 = vmatmul.mubr.f32.gmra.mxu0 %v1433
  %v1501 = vpop.f32.mrf.mxu0
  %v1502 = vadd.f32 %v1429, %v1501
  %v1503 = vpop.f32.mrf.mxu0
  %1504 = vdwg.mxu0
  %v1505 = vtanh.pop %v1502
  %v1506 = vlaneseq
  %v1507 = vshrl.u32 %v1506, 7
  %v1508 = vsub.s32 0, %v1507
  %v1509 = vrot.slane %v45, %v1508
  %v1511 = vsel %vm1328, %v1505, 0
  %1513 = vmatprep.subr.mxu0 0.0
  %1514 = vmatpush1.msra.mxu0 0.0
  %1515 = vmatprep.subr.mxu0 0.0
  %1516 = vmatpush1.msra.mxu0 0.0
  %1517 = vmatprep.subr.mxu0 0.0
  %1518 = vmatpush1.msra.mxu0 0.0
  %1519 = vmatprep.subr.mxu0 0.0
  %1520 = vmatpush1.msra.mxu0 0.0
  %1521 = vmatprep.subr.mxu0 0.0
  %1522 = vmatpush1.msra.mxu0 0.0
  %1523 = vmatprep.subr.mxu0 0.0
  %1524 = vmatpush1.msra.mxu0 0.0
  %1525 = vmatprep.subr.mxu0 0.0
  %1526 = vmatpush1.msra.mxu0 0.0
  %1527 = vmatprep.subr.mxu0 0.0
  %1528 = vmatpush1.msra.mxu0 0.0
  %1529 = vmatprep.subr.mxu0 0.0
  %1530 = vmatpush1.msra.mxu0 %v40
  %1531 = vmatprep.subr.mxu0 0.0
  %1532 = vmatpush1.msra.mxu0 %v39
  %1533 = vmatprep.subr.mxu0 0.0
  %1534 = vmatpush1.msra.mxu0 %v38
  %1535 = vmatprep.subr.mxu0 0.0
  %1536 = vmatpush1.msra.mxu0 %v37
  %1537 = vmatprep.subr.mxu0 0.0
  %1538 = vmatpush1.msra.mxu0 %v36
  %1539 = vmatprep.subr.mxu0 0.0
  %1540 = vmatpush1.msra.mxu0 %v35
  %1541 = vmatprep.subr.mxu0 0.0
  %1542 = vmatpush1.msra.mxu0 %v34
  %1543 = vmatprep.subr.mxu0 0.0
  %1544 = vmatpush1.msra.mxu0 %v33
  %1545 = vmatprep.subr.mxu0 0.0
  %1546 = vmatpush2.msra.mxu0 0.0
  %1547 = vmatprep.subr.mxu0 0.0
  %1548 = vmatpush2.msra.mxu0 0.0
  %1549 = vmatprep.subr.mxu0 0.0
  %1550 = vmatpush2.msra.mxu0 0.0
  %1551 = vmatprep.subr.mxu0 0.0
  %1552 = vmatpush2.msra.mxu0 0.0
  %1553 = vmatprep.subr.mxu0 0.0
  %1554 = vmatpush2.msra.mxu0 0.0
  %1555 = vmatprep.subr.mxu0 0.0
  %1556 = vmatpush2.msra.mxu0 0.0
  %1557 = vmatprep.subr.mxu0 0.0
  %1558 = vmatpush2.msra.mxu0 0.0
  %1559 = vmatprep.subr.mxu0 0.0
  %1560 = vmatpush2.msra.mxu0 0.0
  %1561 = vmatprep.subr.mxu0 0.0
  %1562 = vmatpush2.msra.mxu0 0.0
  %1563 = vmatprep.subr.mxu0 0.0
  %1564 = vmatpush2.msra.mxu0 0.0
  %1565 = vmatprep.subr.mxu0 0.0
  %1566 = vmatpush2.msra.mxu0 0.0
  %1567 = vmatprep.subr.mxu0 0.0
  %1568 = vmatpush2.msra.mxu0 0.0
  %1569 = vmatprep.subr.mxu0 0.0
  %1570 = vmatpush2.msra.mxu0 0.0
  %1571 = vmatprep.subr.mxu0 0.0
  %1572 = vmatpush2.msra.mxu0 0.0
  %1573 = vmatprep.subr.mxu0 0.0
  %1574 = vmatpush2.msra.mxu0 0.0
  %1575 = vmatprep.subr.mxu0 0.0
  %1576 = vmatpush2.msra.mxu0 0.0
  %1577 = vmatprep.mubr.f32.mxu0 0.0
  %1578 = vmatmul.mubr.f32.gmra.mxu0 %v1511
  %v1579 = vpop.f32.mrf.mxu0
  %v1580 = vadd.f32 %v1509, %v1579
  %v1581 = vpop.f32.mrf.mxu0
  %1582 = vdwg.mxu0
  %vm1583 = vcmask 50176
  %v1584 = vsel %vm1583, %v1580, -inf
  %1585 = vmax.xlane.f32.xlu0 %v1584
  %v1586 = vpop.xlane.xlu0 %1585
  %v1587 = vsub.f32 %v1580, %v1586
  %v1588 = vmul.f32 %v1587, 1.442695
  %v1589 = vpow.pop %v1588
  %v1590 = vsel %vm1583, %v1589, 0.0
  %1591 = vadd.xlane.f32.xlu0 %v1590
  %v1592 = vpop.xlane.xlu0 %1591
  %v1593 = vlog2.pop %v1592
  %v1594 = vmul.f32 %v1593, 0.6931472
  %v1595 = vsub.f32 %v1587, %v1594
  %1596 = vrot.lane.b32.xlu0 %v1425, 40
  %v1597 = vpop.permute.xlu0 %1596
  %1600 = vrot.lane.b32.xlu0 %v1419, 8
  %v1601 = vpop.permute.xlu0 %1600
  %vm1603 = vcmask 56320
  %v1604 = vsel %vm1603, %v1595, %v1580
  %vm1605 = vcmask 64512
  %v1606 = vsel %vm1605, %v1604, %v1597
  %vm1607 = vcmask 326656
  %v1608 = vsel %vm1607, %v1606, %v1601
  %vm1609 = vcmask 588800
  %v1610 = vsel %vm1609, %v1608, 0.0
  %1611 = vst [vmem:[%s3] sm:$0x3] %v1610
  // Predicated region
  $region14: #{forward.1} parent=0 // pred_check
    _
  $region15: #{forward.1} parent=0 // pred_check_branch
    %1613 = sbr.rel (0) target = $region17
  $region16: #{forward.1} parent=0 // pred_region
    _
  $region17: #{forward.1} parent=0 // pred_fallthru
    _
  // Predicated region
  $region18: #{forward.1} parent=0 // pred_check
    _
  $region19: #{forward.1} parent=0 // pred_check_branch
    %1615 = sbr.rel (0) target = $region21
  $region20: #{forward.1} parent=0 // pred_region
    _
  $region21: #{forward.1} parent=0 // pred_fallthru
    _

</llo_original>
